<compile_context>
chip_gen: v7x
topology: tpu7x:2x2x1
jax: 0.10.0
libtpu: 0.0.40
codegen_flags: <defaults>
</compile_context>

<pallas_src>
import functools

import jax
import jax.numpy as jnp
from jax.experimental import pallas as pl
from jax.experimental.pallas import tpu as pltpu


F_PAD = 128  # lane-dense width all feature dims (26 / 40 / 24) are padded to


def _round_up(x, m):
    return ((x + m - 1) // m) * m


def _pad_to(x, shape):
    return jnp.pad(x, [(0, s - d) for d, s in zip(x.shape, shape)])


def _sage_layer_kernel(a_ref, xk_ref, xs_ref, ws_ref, wn_ref, b_ref, o_ref, acc_ref,
                       *, out_valid, final):
    """One mean-aggregator SAGEConv layer, tiled over (dst-row tiles, src/K tiles).

    a_ref  : (TM, TK)       bf16  row-normalized adjacency tile (the HBM stream)
    xk_ref : (TK, F_PAD)    bf16  source-node features for this K tile
    xs_ref : (TM, F_PAD)    bf16  destination-node (self) features for this row tile
    ws_ref : (F_PAD, F_PAD) f32   W_self
    wn_ref : (F_PAD, F_PAD) f32   W_neigh
    b_ref  : (1, F_PAD)     f32   bias
    o_ref  : (TM, F_PAD)          output tile (h1 in bf16, or final f32 log-probs)
    acc_ref: (TM, F_PAD)    f32   VMEM accumulator for A @ X over the K axis
    """
    k = pl.program_id(1)

    @pl.when(k == 0)
    def _():
        acc_ref[...] = jnp.zeros_like(acc_ref)

    # Mean aggregation: bf16 x bf16 MXU matmul with f32 accumulation.  No dtype cast
    # on the streamed A tile -- the kernel stays HBM-bound on A, not MXU/VPU-bound.
    acc_ref[...] += jnp.dot(a_ref[...], xk_ref[...],
                            preferred_element_type=jnp.float32)

    @pl.when(k == pl.num_programs(1) - 1)
    def _():
        # Epilogue (<1% of FLOPs): self + neighbor weight matmuls as two dots against
        # separate weight refs (no lane-dim concatenate / (TM, 2*F_PAD) temp).
        x_self = xs_ref[...].astype(jnp.float32)   # (TM, F_PAD), once per row tile
        out = (jnp.dot(x_self, ws_ref[...], preferred_element_type=jnp.float32)
               + jnp.dot(acc_ref[...], wn_ref[...], preferred_element_type=jnp.float32)
               + b_ref[...])
        if final:
            # log_softmax over the `out_valid` real logits; padded lanes are masked
            # to a huge negative and sliced away in the wrapper.
            col = jax.lax.broadcasted_iota(jnp.int32, out.shape, dimension=1)
            logits = jnp.where(col < out_valid, out, jnp.float32(-1e30))
            m = jnp.max(logits, axis=1, keepdims=True)
            z = logits - m
            lse = jnp.log(jnp.sum(jnp.exp(z), axis=1, keepdims=True))
            o_ref[...] = (z - lse).astype(o_ref.dtype)
        else:
            # ReLU; dropout(p=0.5) is identity in eval mode.
            # TODO(synk): training-mode dropout (pltpu.prng_random_bits mask) not emitted.
            o_ref[...] = jnp.maximum(out, 0.0).astype(o_ref.dtype)


def _sage_layer(a_bf16, x_bf16, w_self, w_neigh, b, *, out_valid, final, out_dtype,
                tm, tk):
    n_pad = a_bf16.shape[0]
    grid = (n_pad // tm, n_pad // tk)

    out_bytes = jnp.dtype(out_dtype).itemsize
    flops = 2 * n_pad * n_pad * F_PAD + 2 * 2 * n_pad * F_PAD * F_PAD
    transcendentals = n_pad * F_PAD if final else 0
    bytes_accessed = (
        a_bf16.size * 2                              # A stream (dominant)
        + grid[0] * x_bf16.size * 2                  # X restreamed once per row tile
        + n_pad * F_PAD * 2                          # self features
        + 2 * F_PAD * F_PAD * 4 + F_PAD * 4          # weights + bias
        + n_pad * F_PAD * out_bytes)                 # output

    kernel = functools.partial(_sage_layer_kernel, out_valid=out_valid, final=final)
    return pl.pallas_call(
        kernel,
        out_shape=jax.ShapeDtypeStruct((n_pad, F_PAD), out_dtype),
        grid_spec=pltpu.PrefetchScalarGridSpec(
            num_scalar_prefetch=0,
            grid=grid,
            in_specs=[
                pl.BlockSpec((tm, tk), lambda i, k: (i, k)),        # A tile (streamed)
                pl.BlockSpec((tk, F_PAD), lambda i, k: (k, 0)),     # X rows for K tile
                pl.BlockSpec((tm, F_PAD), lambda i, k: (i, 0)),     # X rows (self term)
                pl.BlockSpec((F_PAD, F_PAD), lambda i, k: (0, 0)),  # W_self
                pl.BlockSpec((F_PAD, F_PAD), lambda i, k: (0, 0)),  # W_neigh
                pl.BlockSpec((1, F_PAD), lambda i, k: (0, 0)),      # bias
            ],
            out_specs=pl.BlockSpec((tm, F_PAD), lambda i, k: (i, 0)),
            scratch_shapes=[pltpu.VMEM((tm, F_PAD), jnp.float32)],
        ),
        compiler_params=pltpu.CompilerParams(
            dimension_semantics=("parallel", "arbitrary"),  # rows across cores, K reduces
            vmem_limit_bytes=48 * 1024 * 1024,              # <= 64 MiB/TC on v7x
        ),
        cost_estimate=pl.CostEstimate(
            flops=flops, transcendentals=transcendentals,
            bytes_accessed=bytes_accessed),
    )(a_bf16, x_bf16, x_bf16, w_self, w_neigh, b)


def _pick_tiles(n, tm_req=2048, tk_req=1024):
    """Lane-aligned tiles with tk | tm | n_pad; prefer an even row-tile count so the
    'parallel' row axis splits evenly across v7x's 2 TensorCores."""
    n128 = _round_up(n, 128)
    tk = max(128, min(tk_req, n128))
    tm = max(tk, min(tm_req, n128))
    tm = (tm // tk) * tk
    n_pad = _round_up(n, tm)
    if (n_pad // tm) % 2 == 1 and tm >= 2 * tk:
        tm //= 2
        n_pad = _round_up(n, tm)
    return tm, tk, n_pad


def prepare_inputs(a_norm, feat, *, tm=2048, tk=1024):
    """One-off preprocessing, hoisted out of the per-forward path: pad the dense
    row-normalized adjacency / features and cast the streamed operands to bf16."""
    n = feat.shape[0]
    tm, tk, n_pad = _pick_tiles(n, tm, tk)
    a_pad = _pad_to(a_norm.astype(jnp.bfloat16), (n_pad, n_pad))
    x_pad = _pad_to(feat.astype(jnp.bfloat16), (n_pad, F_PAD))
    return a_pad, x_pad, tm, tk


def prepare_params(params):
    """Zero-pad weights / bias to lane-dense F_PAD shapes (once, outside the forward)."""
    def pad_w(w):
        return _pad_to(w.astype(jnp.float32), (F_PAD, F_PAD))
    pp = {
        "w1s": pad_w(params["w1s"]), "w1n": pad_w(params["w1n"]),
        "b1": _pad_to(params["b1"].astype(jnp.float32), (1, F_PAD)),
        "w2s": pad_w(params["w2s"]), "w2n": pad_w(params["w2n"]),
        "b2": _pad_to(params["b2"].astype(jnp.float32), (1, F_PAD)),
    }
    out_dim = params["w2s"].shape[1]
    return pp, out_dim


def gsgnet_forward(a_pad, x_pad, pp, *, n, out_dim, tm, tk):
    """GSGNet: SAGEConv(26->40,'mean') + ReLU + dropout(eval) + SAGEConv(40->24,'mean')
    + log_softmax(dim=1), as two tiled Pallas calls."""
    # Hop 1: SAGE mean + ReLU.  h1 round-trips through HBM in bf16 (negligible vs A
    # traffic) because hop 2's aggregation A @ h1 needs all of h1.
    h1 = _sage_layer(a_pad, x_pad, pp["w1s"], pp["w1n"], pp["b1"],
                     out_valid=0, final=False, out_dtype=jnp.bfloat16, tm=tm, tk=tk)
    # Hop 2: SAGE mean + masked log_softmax over the real logits.
    h2 = _sage_layer(a_pad, h1, pp["w2s"], pp["w2n"], pp["b2"],
                     out_valid=out_dim, final=True, out_dtype=jnp.float32, tm=tm, tk=tk)
    return h2[:n, :out_dim]


def _xavier(key, shape):
    fan_in, fan_out = shape
    limit = (6.0 / (fan_in + fan_out)) ** 0.5
    return jax.random.uniform(key, shape, jnp.float32, -limit, limit)


def init_params(key):
    k = jax.random.split(key, 6)
    return {
        # weights stored as (in, out) so the kernel does X @ W
        "w1s": _xavier(k[0], (26, 40)),
        "w1n": _xavier(k[1], (26, 40)),
        "b1": 0.1 * jax.random.normal(k[2], (1, 40), jnp.float32),
        "w2s": _xavier(k[3], (40, 24)),
        "w2n": _xavier(k[4], (40, 24)),
        "b2": 0.1 * jax.random.normal(k[5], (1, 24), jnp.float32),
    }


def build_graph(key, n_nodes):
    """Deterministic random directed graph -> row-normalized dense adjacency."""
    adj = (jax.random.uniform(key, (n_nodes, n_nodes)) < 0.3).astype(jnp.float32)
    adj = adj * (1.0 - jnp.eye(n_nodes, dtype=jnp.float32))  # no self loops
    deg = jnp.sum(adj, axis=1, keepdims=True)                # in-degree per dst row
    return adj / jnp.maximum(deg, 1.0)


def reference_forward(a_norm, feat, p):
    h1 = feat @ p["w1s"] + (a_norm @ feat) @ p["w1n"] + p["b1"]
    h1 = jnp.maximum(h1, 0.0)
    h2 = h1 @ p["w2s"] + (a_norm @ h1) @ p["w2n"] + p["b2"]
    return jax.nn.log_softmax(h2, axis=1)


if __name__ == "__main__":
    key = jax.random.PRNGKey(0)
    k_graph, k_feat, k_params, k_graph2, k_feat2 = jax.random.split(key, 5)
    params = init_params(k_params)
    pp, out_dim = prepare_params(params)

    def run(a_norm, feat, tm_req, tk_req):
        n = feat.shape[0]
        a_pad, x_pad, tm, tk = prepare_inputs(a_norm, feat, tm=tm_req, tk=tk_req)
        fwd = jax.jit(functools.partial(gsgnet_forward, n=n, out_dim=out_dim,
                                        tm=tm, tk=tk))
        return jax.block_until_ready(fwd(a_pad, x_pad, pp))

    # --- toy case matching the original module scale (single-tile grid) ---
    n_nodes = 8
    a_norm = build_graph(k_graph, n_nodes)                        # (8, 8)
    feat = jax.random.normal(k_feat, (n_nodes, 26), jnp.float32)  # (8, 26)
    out = run(a_norm, feat, 2048, 1024)
    ref = reference_forward(a_norm, feat, params)
    assert out.shape == (n_nodes, 24)
    assert jnp.allclose(out, ref, atol=3e-2, rtol=3e-2), \
        float(jnp.max(jnp.abs(out - ref)))

    # --- larger graph with 128x128 tiles to exercise the (rows, K) grid, K-axis
    #     accumulation and the pl.when init/finalize paths ---
    n2 = 200
    a2 = build_graph(k_graph2, n2)
    feat2 = jax.random.normal(k_feat2, (n2, 26), jnp.float32)
    out2 = run(a2, feat2, 128, 128)
    ref2 = reference_forward(a2, feat2, params)
    assert out2.shape == (n2, 24)
    assert jnp.allclose(out2, ref2, atol=3e-2, rtol=3e-2), \
        float(jnp.max(jnp.abs(out2 - ref2)))

    print("KERNEL_OK")
</pallas_src>

<mosaic_0001>
module attributes {stable_mosaic.version = 11 : i64} {
  func.func @_sage_layer_kernel(%arg0: i32, %arg1: i32, %arg2: memref<128x128xbf16, #tpu.memory_space<vmem>>, %arg3: memref<128x128xbf16, #tpu.memory_space<vmem>>, %arg4: memref<128x128xbf16, #tpu.memory_space<vmem>>, %arg5: memref<128x128xf32, #tpu.memory_space<vmem>>, %arg6: memref<128x128xf32, #tpu.memory_space<vmem>>, %arg7: memref<1x128xf32, #tpu.memory_space<vmem>>, %arg8: memref<128x128xf32, #tpu.memory_space<vmem>>, %arg9: memref<128x128xf32, #tpu.memory_space<vmem>>) attributes {dimension_semantics = [#tpu.dimension_semantics<parallel>, #tpu.dimension_semantics<arbitrary>], iteration_bounds = array<i64: 1, 1>, scalar_prefetch = 0 : i64, scratch_operands = 1 : i64, tpu.core_type = #tpu.core_type<tc>, window_params = [{transform_indices = @transform_0, window_bounds = array<i64: 128, 128>}, {transform_indices = @transform_1, window_bounds = array<i64: 128, 128>}, {transform_indices = @transform_2, window_bounds = array<i64: 128, 128>}, {pipeline_mode = #tpu.pipeline_mode<synchronous>, transform_indices = @transform_3, window_bounds = array<i64: 128, 128>}, {pipeline_mode = #tpu.pipeline_mode<synchronous>, transform_indices = @transform_4, window_bounds = array<i64: 128, 128>}, {pipeline_mode = #tpu.pipeline_mode<synchronous>, transform_indices = @transform_5, window_bounds = array<i64: 1, 128>}, {transform_indices = @transform_6, window_bounds = array<i64: 128, 128>}]} {
    %c0_i32 = arith.constant 0 : i32
    %0 = arith.cmpi eq, %arg1, %c0_i32 : i32
    %1 = arith.extui %0 : i1 to i32
    %c0_i32_0 = arith.constant 0 : i32
    %2 = arith.cmpi ne, %1, %c0_i32_0 : i32
    scf.if %2 {
      %cst_10 = arith.constant 0.000000e+00 : f32
      %12 = vector.broadcast %cst_10 : f32 to vector<128x128xf32>
      %c0_11 = arith.constant 0 : index
      %c0_12 = arith.constant 0 : index
      %13 = vector.load %arg9[%c0_11, %c0_12] : memref<128x128xf32, #tpu.memory_space<vmem>>, vector<128x128xf32>
      tpu.vector_store %arg9[%c0_11, %c0_12], %12 {strides = array<i32>} : memref<128x128xf32, #tpu.memory_space<vmem>>, vector<128x128xf32>,
    } else {
    }
    %c0 = arith.constant 0 : index
    %c0_1 = arith.constant 0 : index
    %3 = vector.load %arg9[%c0, %c0_1] : memref<128x128xf32, #tpu.memory_space<vmem>>, vector<128x128xf32>
    %c0_2 = arith.constant 0 : index
    %c0_3 = arith.constant 0 : index
    %4 = vector.load %arg2[%c0_2, %c0_3] : memref<128x128xbf16, #tpu.memory_space<vmem>>, vector<128x128xbf16>
    %c0_4 = arith.constant 0 : index
    %c0_5 = arith.constant 0 : index
    %5 = vector.load %arg3[%c0_4, %c0_5] : memref<128x128xbf16, #tpu.memory_space<vmem>>, vector<128x128xbf16>
    %cst = arith.constant dense<0.000000e+00> : vector<128x128xf32>
    %6 = tpu.matmul %4, %5, %cst {dimension_numbers = #tpu.dot_dimension_numbers<[1], [0], [0], [1], [0, 0, 1, 1], [], []>} : vector<128x128xbf16>, vector<128x128xbf16>, vector<128x128xf32> -> vector<128x128xf32>
    %7 = arith.addf %3, %6 : vector<128x128xf32>
    %c0_6 = arith.constant 0 : index
    %c0_7 = arith.constant 0 : index
    %8 = vector.load %arg9[%c0_6, %c0_7] : memref<128x128xf32, #tpu.memory_space<vmem>>, vector<128x128xf32>
    tpu.vector_store %arg9[%c0_6, %c0_7], %7 {strides = array<i32>} : memref<128x128xf32, #tpu.memory_space<vmem>>, vector<128x128xf32>,
    %c0_i32_8 = arith.constant 0 : i32
    %9 = arith.cmpi eq, %arg1, %c0_i32_8 : i32
    %10 = arith.extui %9 : i1 to i32
    %c0_i32_9 = arith.constant 0 : i32
    %11 = arith.cmpi ne, %10, %c0_i32_9 : i32
    scf.if %11 {
      %c0_10 = arith.constant 0 : index
      %c0_11 = arith.constant 0 : index
      %12 = vector.load %arg4[%c0_10, %c0_11] : memref<128x128xbf16, #tpu.memory_space<vmem>>, vector<128x128xbf16>
      %13 = arith.extf %12 : vector<128x128xbf16> to vector<128x128xf32>
      %c0_12 = arith.constant 0 : index
      %c0_13 = arith.constant 0 : index
      %14 = vector.load %arg5[%c0_12, %c0_13] : memref<128x128xf32, #tpu.memory_space<vmem>>, vector<128x128xf32>
      %cst_14 = arith.constant dense<0.000000e+00> : vector<128x128xf32>
      %15 = tpu.matmul %13, %14, %cst_14 {dimension_numbers = #tpu.dot_dimension_numbers<[1], [0], [0], [1], [0, 0, 1, 1], [], []>} : vector<128x128xf32>, vector<128x128xf32>, vector<128x128xf32> -> vector<128x128xf32>
      %c0_15 = arith.constant 0 : index
      %c0_16 = arith.constant 0 : index
      %16 = vector.load %arg9[%c0_15, %c0_16] : memref<128x128xf32, #tpu.memory_space<vmem>>, vector<128x128xf32>
      %c0_17 = arith.constant 0 : index
      %c0_18 = arith.constant 0 : index
      %17 = vector.load %arg6[%c0_17, %c0_18] : memref<128x128xf32, #tpu.memory_space<vmem>>, vector<128x128xf32>
      %cst_19 = arith.constant dense<0.000000e+00> : vector<128x128xf32>
      %18 = tpu.matmul %16, %17, %cst_19 {dimension_numbers = #tpu.dot_dimension_numbers<[1], [0], [0], [1], [0, 0, 1, 1], [], []>} : vector<128x128xf32>, vector<128x128xf32>, vector<128x128xf32> -> vector<128x128xf32>
      %19 = arith.addf %15, %18 : vector<128x128xf32>
      %c0_20 = arith.constant 0 : index
      %c0_21 = arith.constant 0 : index
      %20 = vector.load %arg7[%c0_20, %c0_21] : memref<1x128xf32, #tpu.memory_space<vmem>>, vector<1x128xf32>
      %21 = vector.broadcast %20 : vector<1x128xf32> to vector<128x128xf32>
      %22 = arith.addf %19, %21 : vector<128x128xf32>
      %23 = tpu.iota {dimensions = array<i32: 1>} : vector<128x128xi32>
      %c24_i32 = arith.constant 24 : i32
      %24 = vector.broadcast %c24_i32 : i32 to vector<128x128xi32>
      %25 = arith.cmpi slt, %23, %24 : vector<128x128xi32>
      %cst_22 = arith.constant -1.000000e+30 : f32
      %26 = vector.broadcast %cst_22 : f32 to vector<128x128xf32>
      %27 = arith.select %25, %22, %26 : vector<128x128xi1>, vector<128x128xf32>
      %cst_23 = arith.constant dense<0xFF800000> : vector<128xf32>
      %28 = vector.multi_reduction <maximumf>, %27, %cst_23 [1] : vector<128x128xf32> to vector<128xf32>
      %29 = vector.shape_cast %28 : vector<128xf32> to vector<128x1xf32>
      %30 = vector.broadcast %29 : vector<128x1xf32> to vector<128x128xf32>
      %31 = arith.subf %27, %30 : vector<128x128xf32>
      %32 = math.exp %31 : vector<128x128xf32>
      %cst_24 = arith.constant dense<0.000000e+00> : vector<128xf32>
      %33 = vector.multi_reduction <add>, %32, %cst_24 [1] : vector<128x128xf32> to vector<128xf32>
      %34 = vector.shape_cast %33 : vector<128xf32> to vector<128x1xf32>
      %35 = math.log %34 : vector<128x1xf32>
      %36 = vector.broadcast %35 : vector<128x1xf32> to vector<128x128xf32>
      %37 = arith.subf %31, %36 : vector<128x128xf32>
      %c0_25 = arith.constant 0 : index
      %c0_26 = arith.constant 0 : index
      %38 = vector.load %arg8[%c0_25, %c0_26] : memref<128x128xf32, #tpu.memory_space<vmem>>, vector<128x128xf32>
      tpu.vector_store %arg8[%c0_25, %c0_26], %37 {strides = array<i32>} : memref<128x128xf32, #tpu.memory_space<vmem>>, vector<128x128xf32>,
    } else {
    }
    return
  }
  func.func @transform_0(%arg0: i32, %arg1: i32) -> (i32, i32) {
    %c0_i32 = arith.constant 0 : i32
    return %arg0, %arg1 : i32, i32
  }
  func.func @transform_1(%arg0: i32, %arg1: i32) -> (i32, i32) {
    %c0_i32 = arith.constant 0 : i32
    %c0_i32_0 = arith.constant 0 : i32
    return %arg1, %c0_i32 : i32, i32
  }
  func.func @transform_2(%arg0: i32, %arg1: i32) -> (i32, i32) {
    %c0_i32 = arith.constant 0 : i32
    %c0_i32_0 = arith.constant 0 : i32
    return %arg0, %c0_i32 : i32, i32
  }
  func.func @transform_3(%arg0: i32, %arg1: i32) -> (i32, i32) {
    %c0_i32 = arith.constant 0 : i32
    %c0_i32_0 = arith.constant 0 : i32
    %c0_i32_1 = arith.constant 0 : i32
    return %c0_i32, %c0_i32_0 : i32, i32
  }
  func.func @transform_4(%arg0: i32, %arg1: i32) -> (i32, i32) {
    %c0_i32 = arith.constant 0 : i32
    %c0_i32_0 = arith.constant 0 : i32
    %c0_i32_1 = arith.constant 0 : i32
    return %c0_i32, %c0_i32_0 : i32, i32
  }
  func.func @transform_5(%arg0: i32, %arg1: i32) -> (i32, i32) {
    %c0_i32 = arith.constant 0 : i32
    %c0_i32_0 = arith.constant 0 : i32
    %c0_i32_1 = arith.constant 0 : i32
    return %c0_i32, %c0_i32_0 : i32, i32
  }
  func.func @transform_6(%arg0: i32, %arg1: i32) -> (i32, i32) {
    %c0_i32 = arith.constant 0 : i32
    %c0_i32_0 = arith.constant 0 : i32
    return %arg0, %c0_i32 : i32, i32
  }
}

module attributes {stable_mosaic.version = 11 : i64} {
  func.func @_sage_layer_kernel(%arg0: i32, %arg1: i32, %arg2: memref<128x128xbf16, #tpu.memory_space<vmem>>, %arg3: memref<128x128xbf16, #tpu.memory_space<vmem>>, %arg4: memref<128x128xbf16, #tpu.memory_space<vmem>>, %arg5: memref<128x128xf32, #tpu.memory_space<vmem>>, %arg6: memref<128x128xf32, #tpu.memory_space<vmem>>, %arg7: memref<1x128xf32, #tpu.memory_space<vmem>>, %arg8: memref<128x128xbf16, #tpu.memory_space<vmem>>, %arg9: memref<128x128xf32, #tpu.memory_space<vmem>>) attributes {dimension_semantics = [#tpu.dimension_semantics<parallel>, #tpu.dimension_semantics<arbitrary>], iteration_bounds = array<i64: 1, 1>, scalar_prefetch = 0 : i64, scratch_operands = 1 : i64, tpu.core_type = #tpu.core_type<tc>, window_params = [{transform_indices = @transform_0, window_bounds = array<i64: 128, 128>}, {transform_indices = @transform_1, window_bounds = array<i64: 128, 128>}, {transform_indices = @transform_2, window_bounds = array<i64: 128, 128>}, {pipeline_mode = #tpu.pipeline_mode<synchronous>, transform_indices = @transform_3, window_bounds = array<i64: 128, 128>}, {pipeline_mode = #tpu.pipeline_mode<synchronous>, transform_indices = @transform_4, window_bounds = array<i64: 128, 128>}, {pipeline_mode = #tpu.pipeline_mode<synchronous>, transform_indices = @transform_5, window_bounds = array<i64: 1, 128>}, {transform_indices = @transform_6, window_bounds = array<i64: 128, 128>}]} {
    %c0_i32 = arith.constant 0 : i32
    %0 = arith.cmpi eq, %arg1, %c0_i32 : i32
    %1 = arith.extui %0 : i1 to i32
    %c0_i32_0 = arith.constant 0 : i32
    %2 = arith.cmpi ne, %1, %c0_i32_0 : i32
    scf.if %2 {
      %cst_10 = arith.constant 0.000000e+00 : f32
      %12 = vector.broadcast %cst_10 : f32 to vector<128x128xf32>
      %c0_11 = arith.constant 0 : index
      %c0_12 = arith.constant 0 : index
      %13 = vector.load %arg9[%c0_11, %c0_12] : memref<128x128xf32, #tpu.memory_space<vmem>>, vector<128x128xf32>
      tpu.vector_store %arg9[%c0_11, %c0_12], %12 {strides = array<i32>} : memref<128x128xf32, #tpu.memory_space<vmem>>, vector<128x128xf32>,
    } else {
    }
    %c0 = arith.constant 0 : index
    %c0_1 = arith.constant 0 : index
    %3 = vector.load %arg9[%c0, %c0_1] : memref<128x128xf32, #tpu.memory_space<vmem>>, vector<128x128xf32>
    %c0_2 = arith.constant 0 : index
    %c0_3 = arith.constant 0 : index
    %4 = vector.load %arg2[%c0_2, %c0_3] : memref<128x128xbf16, #tpu.memory_space<vmem>>, vector<128x128xbf16>
    %c0_4 = arith.constant 0 : index
    %c0_5 = arith.constant 0 : index
    %5 = vector.load %arg3[%c0_4, %c0_5] : memref<128x128xbf16, #tpu.memory_space<vmem>>, vector<128x128xbf16>
    %cst = arith.constant dense<0.000000e+00> : vector<128x128xf32>
    %6 = tpu.matmul %4, %5, %cst {dimension_numbers = #tpu.dot_dimension_numbers<[1], [0], [0], [1], [0, 0, 1, 1], [], []>} : vector<128x128xbf16>, vector<128x128xbf16>, vector<128x128xf32> -> vector<128x128xf32>
    %7 = arith.addf %3, %6 : vector<128x128xf32>
    %c0_6 = arith.constant 0 : index
    %c0_7 = arith.constant 0 : index
    %8 = vector.load %arg9[%c0_6, %c0_7] : memref<128x128xf32, #tpu.memory_space<vmem>>, vector<128x128xf32>
    tpu.vector_store %arg9[%c0_6, %c0_7], %7 {strides = array<i32>} : memref<128x128xf32, #tpu.memory_space<vmem>>, vector<128x128xf32>,
    %c0_i32_8 = arith.constant 0 : i32
    %9 = arith.cmpi eq, %arg1, %c0_i32_8 : i32
    %10 = arith.extui %9 : i1 to i32
    %c0_i32_9 = arith.constant 0 : i32
    %11 = arith.cmpi ne, %10, %c0_i32_9 : i32
    scf.if %11 {
      %c0_10 = arith.constant 0 : index
      %c0_11 = arith.constant 0 : index
      %12 = vector.load %arg4[%c0_10, %c0_11] : memref<128x128xbf16, #tpu.memory_space<vmem>>, vector<128x128xbf16>
      %13 = arith.extf %12 : vector<128x128xbf16> to vector<128x128xf32>
      %c0_12 = arith.constant 0 : index
      %c0_13 = arith.constant 0 : index
      %14 = vector.load %arg5[%c0_12, %c0_13] : memref<128x128xf32, #tpu.memory_space<vmem>>, vector<128x128xf32>
      %cst_14 = arith.constant dense<0.000000e+00> : vector<128x128xf32>
      %15 = tpu.matmul %13, %14, %cst_14 {dimension_numbers = #tpu.dot_dimension_numbers<[1], [0], [0], [1], [0, 0, 1, 1], [], []>} : vector<128x128xf32>, vector<128x128xf32>, vector<128x128xf32> -> vector<128x128xf32>
      %c0_15 = arith.constant 0 : index
      %c0_16 = arith.constant 0 : index
      %16 = vector.load %arg9[%c0_15, %c0_16] : memref<128x128xf32, #tpu.memory_space<vmem>>, vector<128x128xf32>
      %c0_17 = arith.constant 0 : index
      %c0_18 = arith.constant 0 : index
      %17 = vector.load %arg6[%c0_17, %c0_18] : memref<128x128xf32, #tpu.memory_space<vmem>>, vector<128x128xf32>
      %cst_19 = arith.constant dense<0.000000e+00> : vector<128x128xf32>
      %18 = tpu.matmul %16, %17, %cst_19 {dimension_numbers = #tpu.dot_dimension_numbers<[1], [0], [0], [1], [0, 0, 1, 1], [], []>} : vector<128x128xf32>, vector<128x128xf32>, vector<128x128xf32> -> vector<128x128xf32>
      %19 = arith.addf %15, %18 : vector<128x128xf32>
      %c0_20 = arith.constant 0 : index
      %c0_21 = arith.constant 0 : index
      %20 = vector.load %arg7[%c0_20, %c0_21] : memref<1x128xf32, #tpu.memory_space<vmem>>, vector<1x128xf32>
      %21 = vector.broadcast %20 : vector<1x128xf32> to vector<128x128xf32>
      %22 = arith.addf %19, %21 : vector<128x128xf32>
      %cst_22 = arith.constant 0.000000e+00 : f32
      %23 = vector.broadcast %cst_22 : f32 to vector<128x128xf32>
      %24 = arith.maximumf %22, %23 : vector<128x128xf32>
      %25 = arith.truncf %24 : vector<128x128xf32> to vector<128x128xbf16>
      %c0_23 = arith.constant 0 : index
      %c0_24 = arith.constant 0 : index
      %26 = vector.load %arg8[%c0_23, %c0_24] : memref<128x128xbf16, #tpu.memory_space<vmem>>, vector<128x128xbf16>
      tpu.vector_store %arg8[%c0_23, %c0_24], %25 {strides = array<i32>} : memref<128x128xbf16, #tpu.memory_space<vmem>>, vector<128x128xbf16>,
    } else {
    }
    return
  }
  func.func @transform_0(%arg0: i32, %arg1: i32) -> (i32, i32) {
    %c0_i32 = arith.constant 0 : i32
    return %arg0, %arg1 : i32, i32
  }
  func.func @transform_1(%arg0: i32, %arg1: i32) -> (i32, i32) {
    %c0_i32 = arith.constant 0 : i32
    %c0_i32_0 = arith.constant 0 : i32
    return %arg1, %c0_i32 : i32, i32
  }
  func.func @transform_2(%arg0: i32, %arg1: i32) -> (i32, i32) {
    %c0_i32 = arith.constant 0 : i32
    %c0_i32_0 = arith.constant 0 : i32
    return %arg0, %c0_i32 : i32, i32
  }
  func.func @transform_3(%arg0: i32, %arg1: i32) -> (i32, i32) {
    %c0_i32 = arith.constant 0 : i32
    %c0_i32_0 = arith.constant 0 : i32
    %c0_i32_1 = arith.constant 0 : i32
    return %c0_i32, %c0_i32_0 : i32, i32
  }
  func.func @transform_4(%arg0: i32, %arg1: i32) -> (i32, i32) {
    %c0_i32 = arith.constant 0 : i32
    %c0_i32_0 = arith.constant 0 : i32
    %c0_i32_1 = arith.constant 0 : i32
    return %c0_i32, %c0_i32_0 : i32, i32
  }
  func.func @transform_5(%arg0: i32, %arg1: i32) -> (i32, i32) {
    %c0_i32 = arith.constant 0 : i32
    %c0_i32_0 = arith.constant 0 : i32
    %c0_i32_1 = arith.constant 0 : i32
    return %c0_i32, %c0_i32_0 : i32, i32
  }
  func.func @transform_6(%arg0: i32, %arg1: i32) -> (i32, i32) {
    %c0_i32 = arith.constant 0 : i32
    %c0_i32_0 = arith.constant 0 : i32
    return %arg0, %c0_i32 : i32, i32
  }
}

</mosaic_0001>

<llo_original>
// kernel: gsgnet_forward.3
$region0: #{gsgnet_forward.3}
  #allocation0 [shape = 'u32[]', space=smem, size = 0x4, offset = 0x4, fixed_abs, tag = 'smem constant byte address 0x4 - core index']
  #allocation1 [shape = 'u32[144,128]{1,0:T(1,128)}', space=vmem, size = 0x12000, scoped, tag = 'internal scratch']
  #allocation2 [shape = 'f32[128,128]{1,0:T(8,128)}', space=vmem, size = 0x10000, scoped, tag = 'scratch operand']
  %s0 = inlined_call_operand.vmem [shape: bf16[128,128], index: 0, kind: input, shape index: {}]
  %s1 = inlined_call_operand.vmem [shape: bf16[128,128], index: 1, kind: input, shape index: {}, may-alias: {1,2}]
  %s2 = inlined_call_operand.vmem [shape: bf16[128,128], index: 2, kind: input, shape index: {}, may-alias: {1,2}]
  %s3 = inlined_call_operand.vmem [shape: f32[128,128], index: 3, kind: input, shape index: {}]
  %s4 = inlined_call_operand.vmem [shape: f32[128,128], index: 4, kind: input, shape index: {}]
  %s5 = inlined_call_operand.vmem [shape: f32[1,128], index: 5, kind: input, shape index: {}]
  %s6 = inlined_call_operand.vmem [shape: f32[128,128], index: 6, kind: output, shape index: {}]
  %s7 = sld [smem:[#allocation0]]
  $region42: #{gsgnet_forward.3} parent=0
    _
  %s9 = ssub.s32 1, %s7
  %s10 = scalar_select 0, %s9, %s7
  // Predicated region
  $region2: #{gsgnet_forward.3} parent=0 // pred_check
    _
  $region3: #{gsgnet_forward.3} parent=0 // pred_check_branch
    %12 = sbr.rel (0) target = $region5
  $region4: #{gsgnet_forward.3} parent=0 // pred_region
    _
  $region5: #{gsgnet_forward.3} parent=0 // pred_fallthru
    _
  // Predicated region
  $region6: #{gsgnet_forward.3} parent=0 // pred_check
    _
  $region7: #{gsgnet_forward.3} parent=0 // pred_check_branch
    %14 = sbr.rel (0) target = $region9
  $region8: #{gsgnet_forward.3} parent=0 // pred_region
    _
  $region9: #{gsgnet_forward.3} parent=0 // pred_fallthru
    _
  // Predicated region
  $region10: #{gsgnet_forward.3} parent=0 // pred_check
    _
  $region11: #{gsgnet_forward.3} parent=0 // pred_check_branch
    %16 = sbr.rel (0) target = $region13
  $region12: #{gsgnet_forward.3} parent=0 // pred_region
    _
  $region13: #{gsgnet_forward.3} parent=0 // pred_fallthru
    _
  // Predicated region
  $region14: #{gsgnet_forward.3} parent=0 // pred_check
    _
  $region15: #{gsgnet_forward.3} parent=0 // pred_check_branch
    %18 = sbr.rel (0) target = $region17
  $region16: #{gsgnet_forward.3} parent=0 // pred_region
    _
  $region17: #{gsgnet_forward.3} parent=0 // pred_fallthru
    _
  // Predicated region
  $region18: #{gsgnet_forward.3} parent=0 // pred_check
    _
  $region19: #{gsgnet_forward.3} parent=0 // pred_check_branch
    %20 = sbr.rel (0) target = $region21
  $region20: #{gsgnet_forward.3} parent=0 // pred_region
    _
  $region21: #{gsgnet_forward.3} parent=0 // pred_fallthru
    _
  // Predicated region
  $region22: #{gsgnet_forward.3} parent=0 // pred_check
    _
  $region23: #{gsgnet_forward.3} parent=0 // pred_check_branch
    %22 = sbr.rel (0) target = $region25
  $region24: #{gsgnet_forward.3} parent=0 // pred_region
    _
  $region25: #{gsgnet_forward.3} parent=0 // pred_fallthru
    _
  %p24 = scmp.eq.s32.totalorder 0, 0
  // Predicated region
  $region26: #{gsgnet_forward.3} parent=0 // pred_check
    %p25 = pneg %p24
  $region27: #{gsgnet_forward.3} parent=0 // pred_check_branch
    %27 = sbr.rel (%p25) target = $region29
  $region28: #{gsgnet_forward.3} parent=0 // pred_region
    %28 = vst [vmem:[#allocation2] sm:$0xff] 0.0
    %29 = vst [vmem:[#allocation2 + $0x8] sm:$0xff] 0.0
    %30 = vst [vmem:[#allocation2 + $0x10] sm:$0xff] 0.0
    %31 = vst [vmem:[#allocation2 + $0x18] sm:$0xff] 0.0
    %32 = vst [vmem:[#allocation2 + $0x20] sm:$0xff] 0.0
    %33 = vst [vmem:[#allocation2 + $0x28] sm:$0xff] 0.0
    %34 = vst [vmem:[#allocation2 + $0x30] sm:$0xff] 0.0
    %35 = vst [vmem:[#allocation2 + $0x38] sm:$0xff] 0.0
    %36 = vst [vmem:[#allocation2 + $0x40] sm:$0xff] 0.0
    %37 = vst [vmem:[#allocation2 + $0x48] sm:$0xff] 0.0
    %38 = vst [vmem:[#allocation2 + $0x50] sm:$0xff] 0.0
    %39 = vst [vmem:[#allocation2 + $0x58] sm:$0xff] 0.0
    %40 = vst [vmem:[#allocation2 + $0x60] sm:$0xff] 0.0
    %41 = vst [vmem:[#allocation2 + $0x68] sm:$0xff] 0.0
    %42 = vst [vmem:[#allocation2 + $0x70] sm:$0xff] 0.0
    %43 = vst [vmem:[#allocation2 + $0x78] sm:$0xff] 0.0
  $region29: #{gsgnet_forward.3} parent=0 // pred_fallthru
    _
  %v44 = vld [vmem:[#allocation2] sm:$0xff]
  %v45 = vld [vmem:[#allocation2 + $0x8] sm:$0xff]
  %v46 = vld [vmem:[#allocation2 + $0x10] sm:$0xff]
  %v47 = vld [vmem:[#allocation2 + $0x18] sm:$0xff]
  %v48 = vld [vmem:[#allocation2 + $0x20] sm:$0xff]
  %v49 = vld [vmem:[#allocation2 + $0x28] sm:$0xff]
  %v50 = vld [vmem:[#allocation2 + $0x30] sm:$0xff]
  %v51 = vld [vmem:[#allocation2 + $0x38] sm:$0xff]
  %v52 = vld [vmem:[#allocation2 + $0x40] sm:$0xff]
  %v53 = vld [vmem:[#allocation2 + $0x48] sm:$0xff]
  %v54 = vld [vmem:[#allocation2 + $0x50] sm:$0xff]
  %v55 = vld [vmem:[#allocation2 + $0x58] sm:$0xff]
  %v56 = vld [vmem:[#allocation2 + $0x60] sm:$0xff]
  %v57 = vld [vmem:[#allocation2 + $0x68] sm:$0xff]
  %v58 = vld [vmem:[#allocation2 + $0x70] sm:$0xff]
  %v59 = vld [vmem:[#allocation2 + $0x78] sm:$0xff]
  %v60 = vld [vmem:[%s0] sm:$0xf]
  %v61 = vld [vmem:[%s0 + $0x4] sm:$0xf]
  %v62 = vld [vmem:[%s0 + $0x8] sm:$0xf]
  %v63 = vld [vmem:[%s0 + $0xc] sm:$0xf]
  %v64 = vld [vmem:[%s0 + $0x10] sm:$0xf]
  %v65 = vld [vmem:[%s0 + $0x14] sm:$0xf]
  %v66 = vld [vmem:[%s0 + $0x18] sm:$0xf]
  %v67 = vld [vmem:[%s0 + $0x1c] sm:$0xf]
  %v68 = vld [vmem:[%s0 + $0x20] sm:$0xf]
  %v69 = vld [vmem:[%s0 + $0x24] sm:$0xf]
  %v70 = vld [vmem:[%s0 + $0x28] sm:$0xf]
  %v71 = vld [vmem:[%s0 + $0x2c] sm:$0xf]
  %v72 = vld [vmem:[%s0 + $0x30] sm:$0xf]
  %v73 = vld [vmem:[%s0 + $0x34] sm:$0xf]
  %v74 = vld [vmem:[%s0 + $0x38] sm:$0xf]
  %v75 = vld [vmem:[%s0 + $0x3c] sm:$0xf]
  %v76 = vld [vmem:[%s1] sm:$0xf]
  %v77 = vld [vmem:[%s1 + $0x4] sm:$0xf]
  %v78 = vld [vmem:[%s1 + $0x8] sm:$0xf]
  %v79 = vld [vmem:[%s1 + $0xc] sm:$0xf]
  %v80 = vld [vmem:[%s1 + $0x10] sm:$0xf]
  %v81 = vld [vmem:[%s1 + $0x14] sm:$0xf]
  %v82 = vld [vmem:[%s1 + $0x18] sm:$0xf]
  %v83 = vld [vmem:[%s1 + $0x1c] sm:$0xf]
  %v84 = vld [vmem:[%s1 + $0x20] sm:$0xf]
  %v85 = vld [vmem:[%s1 + $0x24] sm:$0xf]
  %v86 = vld [vmem:[%s1 + $0x28] sm:$0xf]
  %v87 = vld [vmem:[%s1 + $0x2c] sm:$0xf]
  %v88 = vld [vmem:[%s1 + $0x30] sm:$0xf]
  %v89 = vld [vmem:[%s1 + $0x34] sm:$0xf]
  %v90 = vld [vmem:[%s1 + $0x38] sm:$0xf]
  %v91 = vld [vmem:[%s1 + $0x3c] sm:$0xf]
  %v108 = vunpack.c.l.b16 %v60
  %v109 = vunpack.c.l.b16 %v61
  %v110 = vunpack.c.l.b16 %v62
  %v111 = vunpack.c.l.b16 %v63
  %v112 = vunpack.c.l.b16 %v64
  %v113 = vunpack.c.l.b16 %v65
  %v114 = vunpack.c.l.b16 %v66
  %v115 = vunpack.c.l.b16 %v67
  %v116 = vunpack.c.l.b16 %v68
  %v117 = vunpack.c.l.b16 %v69
  %v118 = vunpack.c.l.b16 %v70
  %v119 = vunpack.c.l.b16 %v71
  %v120 = vunpack.c.l.b16 %v72
  %v121 = vunpack.c.l.b16 %v73
  %v122 = vunpack.c.l.b16 %v74
  %v123 = vunpack.c.l.b16 %v75
  %v124 = vpack.c.b16 %v109, %v108
  %v125 = vpack.c.b16 %v111, %v110
  %v126 = vpack.c.b16 %v113, %v112
  %v127 = vpack.c.b16 %v115, %v114
  %v128 = vpack.c.b16 %v117, %v116
  %v129 = vpack.c.b16 %v119, %v118
  %v130 = vpack.c.b16 %v121, %v120
  %v131 = vpack.c.b16 %v123, %v122
  %v156 = vunpack.c.l.b16 %v76
  %v157 = vunpack.c.l.b16 %v77
  %v158 = vunpack.c.l.b16 %v78
  %v159 = vunpack.c.l.b16 %v79
  %v160 = vunpack.c.l.b16 %v80
  %v161 = vunpack.c.l.b16 %v81
  %v162 = vunpack.c.l.b16 %v82
  %v163 = vunpack.c.l.b16 %v83
  %v164 = vunpack.c.l.b16 %v84
  %v165 = vunpack.c.l.b16 %v85
  %v166 = vunpack.c.l.b16 %v86
  %v167 = vunpack.c.l.b16 %v87
  %v168 = vunpack.c.l.b16 %v88
  %v169 = vunpack.c.l.b16 %v89
  %v170 = vunpack.c.l.b16 %v90
  %v171 = vunpack.c.l.b16 %v91
  %v172 = vpack.c.b16 %v157, %v156
  %v173 = vpack.c.b16 %v159, %v158
  %v174 = vpack.c.b16 %v161, %v160
  %v175 = vpack.c.b16 %v163, %v162
  %v176 = vpack.c.b16 %v165, %v164
  %v177 = vpack.c.b16 %v167, %v166
  %v178 = vpack.c.b16 %v169, %v168
  %v179 = vpack.c.b16 %v171, %v170
  %188 = vmatprep.subr.bf16.mxu0 0
  %189 = vmatpush1.bf16.msra.mxu0 %v172
  %190 = vmatprep.subr.bf16.mxu0 0
  %191 = vmatpush1.bf16.msra.mxu0 %v173
  %192 = vmatprep.subr.bf16.mxu0 0
  %193 = vmatpush1.bf16.msra.mxu0 %v174
  %194 = vmatprep.subr.bf16.mxu0 0
  %195 = vmatpush1.bf16.msra.mxu0 %v175
  %196 = vmatprep.subr.bf16.mxu0 0
  %197 = vmatpush1.bf16.msra.mxu0 %v176
  %198 = vmatprep.subr.bf16.mxu0 0
  %199 = vmatpush1.bf16.msra.mxu0 %v177
  %200 = vmatprep.subr.bf16.mxu0 0
  %201 = vmatpush1.bf16.msra.mxu0 %v178
  %202 = vmatprep.subr.bf16.mxu0 0
  %203 = vmatpush1.bf16.msra.mxu0 %v179
  %204 = vmatprep.subr.bf16.mxu0 0
  %205 = vmatpush1.bf16.msra.mxu0 0
  %206 = vmatprep.subr.bf16.mxu0 0
  %207 = vmatpush1.bf16.msra.mxu0 0
  %208 = vmatprep.subr.bf16.mxu0 0
  %209 = vmatpush1.bf16.msra.mxu0 0
  %210 = vmatprep.subr.bf16.mxu0 0
  %211 = vmatpush1.bf16.msra.mxu0 0
  %212 = vmatprep.subr.bf16.mxu0 0
  %213 = vmatpush1.bf16.msra.mxu0 0
  %214 = vmatprep.subr.bf16.mxu0 0
  %215 = vmatpush1.bf16.msra.mxu0 0
  %216 = vmatprep.subr.bf16.mxu0 0
  %217 = vmatpush1.bf16.msra.mxu0 0
  %218 = vmatprep.subr.bf16.mxu0 0
  %219 = vmatpush1.bf16.msra.mxu0 0
  %220 = vmatprep.mubr.bf16.mxu0 0
  %221 = vmatmul.mubr.bf16.gmra.mrb[0].mxu0 %v124
  %v222 = vpop.f32.mrb[0].mxu0
  %v223 = vadd.f32 0.0, %v222
  %v224 = vpop.f32.mrb[0].mxu0
  %v225 = vpop.f32.mrb[0].mxu0
  %v226 = vadd.f32 0.0, %v225
  %v227 = vpop.f32.mrb[0].mxu0
  %228 = vmatprep.mubr.bf16.mxu0 0
  %229 = vmatmul.mubr.bf16.gmra.mrb[0].mxu0 %v125
  %v230 = vpop.f32.mrb[0].mxu0
  %v231 = vadd.f32 0.0, %v230
  %v232 = vpop.f32.mrb[0].mxu0
  %v233 = vpop.f32.mrb[0].mxu0
  %v234 = vadd.f32 0.0, %v233
  %v235 = vpop.f32.mrb[0].mxu0
  %236 = vmatprep.mubr.bf16.mxu0 0
  %237 = vmatmul.mubr.bf16.gmra.mrb[0].mxu0 %v126
  %v238 = vpop.f32.mrb[0].mxu0
  %v239 = vadd.f32 0.0, %v238
  %v240 = vpop.f32.mrb[0].mxu0
  %v241 = vpop.f32.mrb[0].mxu0
  %v242 = vadd.f32 0.0, %v241
  %v243 = vpop.f32.mrb[0].mxu0
  %244 = vmatprep.mubr.bf16.mxu0 0
  %245 = vmatmul.mubr.bf16.gmra.mrb[0].mxu0 %v127
  %v246 = vpop.f32.mrb[0].mxu0
  %v247 = vadd.f32 0.0, %v246
  %v248 = vpop.f32.mrb[0].mxu0
  %v249 = vpop.f32.mrb[0].mxu0
  %v250 = vadd.f32 0.0, %v249
  %v251 = vpop.f32.mrb[0].mxu0
  %252 = vmatprep.mubr.bf16.mxu0 0
  %253 = vmatmul.mubr.bf16.gmra.mrb[0].mxu0 %v128
  %v254 = vpop.f32.mrb[0].mxu0
  %v255 = vadd.f32 0.0, %v254
  %v256 = vpop.f32.mrb[0].mxu0
  %v257 = vpop.f32.mrb[0].mxu0
  %v258 = vadd.f32 0.0, %v257
  %v259 = vpop.f32.mrb[0].mxu0
  %260 = vmatprep.mubr.bf16.mxu0 0
  %261 = vmatmul.mubr.bf16.gmra.mrb[0].mxu0 %v129
  %v262 = vpop.f32.mrb[0].mxu0
  %v263 = vadd.f32 0.0, %v262
  %v264 = vpop.f32.mrb[0].mxu0
  %v265 = vpop.f32.mrb[0].mxu0
  %v266 = vadd.f32 0.0, %v265
  %v267 = vpop.f32.mrb[0].mxu0
  %268 = vmatprep.mubr.bf16.mxu0 0
  %269 = vmatmul.mubr.bf16.gmra.mrb[0].mxu0 %v130
  %v270 = vpop.f32.mrb[0].mxu0
  %v271 = vadd.f32 0.0, %v270
  %v272 = vpop.f32.mrb[0].mxu0
  %v273 = vpop.f32.mrb[0].mxu0
  %v274 = vadd.f32 0.0, %v273
  %v275 = vpop.f32.mrb[0].mxu0
  %276 = vmatprep.mubr.bf16.mxu0 0
  %277 = vmatmul.mubr.bf16.gmra.mrb[0].mxu0 %v131
  %v278 = vpop.f32.mrb[0].mxu0
  %v279 = vadd.f32 0.0, %v278
  %v280 = vpop.f32.mrb[0].mxu0
  %v281 = vpop.f32.mrb[0].mxu0
  %v282 = vadd.f32 0.0, %v281
  %v283 = vpop.f32.mrb[0].mxu0
  %284 = vdwg.mxu0
  %v285 = vadd.f32 %v44, %v223
  %v286 = vadd.f32 %v45, %v226
  %v287 = vadd.f32 %v46, %v231
  %v288 = vadd.f32 %v47, %v234
  %v289 = vadd.f32 %v48, %v239
  %v290 = vadd.f32 %v49, %v242
  %v291 = vadd.f32 %v50, %v247
  %v292 = vadd.f32 %v51, %v250
  %v293 = vadd.f32 %v52, %v255
  %v294 = vadd.f32 %v53, %v258
  %v295 = vadd.f32 %v54, %v263
  %v296 = vadd.f32 %v55, %v266
  %v297 = vadd.f32 %v56, %v271
  %v298 = vadd.f32 %v57, %v274
  %v299 = vadd.f32 %v58, %v279
  %v300 = vadd.f32 %v59, %v282
  %301 = vst [vmem:[#allocation2] sm:$0xff] %v285
  %302 = vst [vmem:[#allocation2 + $0x8] sm:$0xff] %v286
  %303 = vst [vmem:[#allocation2 + $0x10] sm:$0xff] %v287
  %304 = vst [vmem:[#allocation2 + $0x18] sm:$0xff] %v288
  %305 = vst [vmem:[#allocation2 + $0x20] sm:$0xff] %v289
  %306 = vst [vmem:[#allocation2 + $0x28] sm:$0xff] %v290
  %307 = vst [vmem:[#allocation2 + $0x30] sm:$0xff] %v291
  %308 = vst [vmem:[#allocation2 + $0x38] sm:$0xff] %v292
  %309 = vst [vmem:[#allocation2 + $0x40] sm:$0xff] %v293
  %310 = vst [vmem:[#allocation2 + $0x48] sm:$0xff] %v294
  %311 = vst [vmem:[#allocation2 + $0x50] sm:$0xff] %v295
  %312 = vst [vmem:[#allocation2 + $0x58] sm:$0xff] %v296
  %313 = vst [vmem:[#allocation2 + $0x60] sm:$0xff] %v297
  %314 = vst [vmem:[#allocation2 + $0x68] sm:$0xff] %v298
  %315 = vst [vmem:[#allocation2 + $0x70] sm:$0xff] %v299
  %316 = vst [vmem:[#allocation2 + $0x78] sm:$0xff] %v300
  // Predicated region
  $region30: #{gsgnet_forward.3} parent=0 // pred_check
    %p317 = pneg %p24
  $region31: #{gsgnet_forward.3} parent=0 // pred_check_branch
    %319 = sbr.rel (%p317) target = $region33
  $region32: #{gsgnet_forward.3} parent=0 // pred_region
    %v320 = vld [vmem:[%s2] sm:$0xf]
    %v321 = vld [vmem:[%s2 + $0x4] sm:$0xf]
    %v322 = vld [vmem:[%s2 + $0x8] sm:$0xf]
    %v323 = vld [vmem:[%s2 + $0xc] sm:$0xf]
    %v324 = vld [vmem:[%s2 + $0x10] sm:$0xf]
    %v325 = vld [vmem:[%s2 + $0x14] sm:$0xf]
    %v326 = vld [vmem:[%s2 + $0x18] sm:$0xf]
    %v327 = vld [vmem:[%s2 + $0x1c] sm:$0xf]
    %v328 = vld [vmem:[%s2 + $0x20] sm:$0xf]
    %v329 = vld [vmem:[%s2 + $0x24] sm:$0xf]
    %v330 = vld [vmem:[%s2 + $0x28] sm:$0xf]
    %v331 = vld [vmem:[%s2 + $0x2c] sm:$0xf]
    %v332 = vld [vmem:[%s2 + $0x30] sm:$0xf]
    %v333 = vld [vmem:[%s2 + $0x34] sm:$0xf]
    %v334 = vld [vmem:[%s2 + $0x38] sm:$0xf]
    %v335 = vld [vmem:[%s2 + $0x3c] sm:$0xf]
    %v336 = vunpack.c.l.bf16 %v320
    %v337 = vunpack.c.l.bf16 %v321
    %v338 = vunpack.c.l.bf16 %v322
    %v339 = vunpack.c.l.bf16 %v323
    %v340 = vunpack.c.l.bf16 %v324
    %v341 = vunpack.c.l.bf16 %v325
    %v342 = vunpack.c.l.bf16 %v326
    %v343 = vunpack.c.l.bf16 %v327
    %v344 = vunpack.c.l.bf16 %v328
    %v345 = vunpack.c.l.bf16 %v329
    %v346 = vunpack.c.l.bf16 %v330
    %v347 = vunpack.c.l.bf16 %v331
    %v348 = vunpack.c.l.bf16 %v332
    %v349 = vunpack.c.l.bf16 %v333
    %v350 = vunpack.c.l.bf16 %v334
    %v351 = vunpack.c.l.bf16 %v335
    %v352 = vld [vmem:[%s3] sm:$0xff]
    %v353 = vld [vmem:[%s3 + $0x8] sm:$0xff]
    %v354 = vld [vmem:[%s3 + $0x10] sm:$0xff]
    %v355 = vld [vmem:[%s3 + $0x18] sm:$0xff]
    %v356 = vld [vmem:[%s3 + $0x20] sm:$0xff]
    %v357 = vld [vmem:[%s3 + $0x28] sm:$0xff]
    %v358 = vld [vmem:[%s3 + $0x30] sm:$0xff]
    %v359 = vld [vmem:[%s3 + $0x38] sm:$0xff]
    %v360 = vld [vmem:[%s3 + $0x40] sm:$0xff]
    %v361 = vld [vmem:[%s3 + $0x48] sm:$0xff]
    %v362 = vld [vmem:[%s3 + $0x50] sm:$0xff]
    %v363 = vld [vmem:[%s3 + $0x58] sm:$0xff]
    %v364 = vld [vmem:[%s3 + $0x60] sm:$0xff]
    %v365 = vld [vmem:[%s3 + $0x68] sm:$0xff]
    %v366 = vld [vmem:[%s3 + $0x70] sm:$0xff]
    %v367 = vld [vmem:[%s3 + $0x78] sm:$0xff]
    %v368 = vld [vmem:[#allocation2] sm:$0xff]
    %v369 = vld [vmem:[#allocation2 + $0x8] sm:$0xff]
    %v370 = vld [vmem:[#allocation2 + $0x10] sm:$0xff]
    %v371 = vld [vmem:[#allocation2 + $0x18] sm:$0xff]
    %v372 = vld [vmem:[#allocation2 + $0x20] sm:$0xff]
    %v373 = vld [vmem:[#allocation2 + $0x28] sm:$0xff]
    %v374 = vld [vmem:[#allocation2 + $0x30] sm:$0xff]
    %v375 = vld [vmem:[#allocation2 + $0x38] sm:$0xff]
    %v376 = vld [vmem:[#allocation2 + $0x40] sm:$0xff]
    %v377 = vld [vmem:[#allocation2 + $0x48] sm:$0xff]
    %v378 = vld [vmem:[#allocation2 + $0x50] sm:$0xff]
    %v379 = vld [vmem:[#allocation2 + $0x58] sm:$0xff]
    %v380 = vld [vmem:[#allocation2 + $0x60] sm:$0xff]
    %v381 = vld [vmem:[#allocation2 + $0x68] sm:$0xff]
    %v382 = vld [vmem:[#allocation2 + $0x70] sm:$0xff]
    %v383 = vld [vmem:[#allocation2 + $0x78] sm:$0xff]
    %v384 = vld [vmem:[%s4] sm:$0xff]
    %v385 = vld [vmem:[%s4 + $0x8] sm:$0xff]
    %v386 = vld [vmem:[%s4 + $0x10] sm:$0xff]
    %v387 = vld [vmem:[%s4 + $0x18] sm:$0xff]
    %v388 = vld [vmem:[%s4 + $0x20] sm:$0xff]
    %v389 = vld [vmem:[%s4 + $0x28] sm:$0xff]
    %v390 = vld [vmem:[%s4 + $0x30] sm:$0xff]
    %v391 = vld [vmem:[%s4 + $0x38] sm:$0xff]
    %v392 = vld [vmem:[%s4 + $0x40] sm:$0xff]
    %v393 = vld [vmem:[%s4 + $0x48] sm:$0xff]
    %v394 = vld [vmem:[%s4 + $0x50] sm:$0xff]
    %v395 = vld [vmem:[%s4 + $0x58] sm:$0xff]
    %v396 = vld [vmem:[%s4 + $0x60] sm:$0xff]
    %v397 = vld [vmem:[%s4 + $0x68] sm:$0xff]
    %v398 = vld [vmem:[%s4 + $0x70] sm:$0xff]
    %v399 = vld [vmem:[%s4 + $0x78] sm:$0xff]
    %400 = vmatprep.subr.mxu0 0.0
    %401 = vmatpush1.msra.mxu0 %v384
    %402 = vmatprep.subr.mxu0 0.0
    %403 = vmatpush1.msra.mxu0 %v385
    %404 = vmatprep.subr.mxu0 0.0
    %405 = vmatpush1.msra.mxu0 %v386
    %406 = vmatprep.subr.mxu0 0.0
    %407 = vmatpush1.msra.mxu0 %v387
    %408 = vmatprep.subr.mxu0 0.0
    %409 = vmatpush1.msra.mxu0 %v388
    %410 = vmatprep.subr.mxu0 0.0
    %411 = vmatpush1.msra.mxu0 %v389
    %412 = vmatprep.subr.mxu0 0.0
    %413 = vmatpush1.msra.mxu0 %v390
    %414 = vmatprep.subr.mxu0 0.0
    %415 = vmatpush1.msra.mxu0 %v391
    %416 = vmatprep.subr.mxu0 0.0
    %417 = vmatpush1.msra.mxu0 %v392
    %418 = vmatprep.subr.mxu0 0.0
    %419 = vmatpush1.msra.mxu0 %v393
    %420 = vmatprep.subr.mxu0 0.0
    %421 = vmatpush1.msra.mxu0 %v394
    %422 = vmatprep.subr.mxu0 0.0
    %423 = vmatpush1.msra.mxu0 %v395
    %424 = vmatprep.subr.mxu0 0.0
    %425 = vmatpush1.msra.mxu0 %v396
    %426 = vmatprep.subr.mxu0 0.0
    %427 = vmatpush1.msra.mxu0 %v397
    %428 = vmatprep.subr.mxu0 0.0
    %429 = vmatpush1.msra.mxu0 %v398
    %430 = vmatprep.subr.mxu0 0.0
    %431 = vmatpush1.msra.mxu0 %v399
    %432 = vmatprep.subr.mxu0 0.0
    %433 = vmatpush1.msra.mxu0 0.0
    %434 = vmatprep.subr.mxu0 0.0
    %435 = vmatpush1.msra.mxu0 0.0
    %436 = vmatprep.subr.mxu0 0.0
    %437 = vmatpush1.msra.mxu0 0.0
    %438 = vmatprep.subr.mxu0 0.0
    %439 = vmatpush1.msra.mxu0 0.0
    %440 = vmatprep.subr.mxu0 0.0
    %441 = vmatpush1.msra.mxu0 0.0
    %442 = vmatprep.subr.mxu0 0.0
    %443 = vmatpush1.msra.mxu0 0.0
    %444 = vmatprep.subr.mxu0 0.0
    %445 = vmatpush1.msra.mxu0 0.0
    %446 = vmatprep.subr.mxu0 0.0
    %447 = vmatpush1.msra.mxu0 0.0
    %448 = vmatprep.subr.mxu0 0.0
    %449 = vmatpush1.msra.mxu0 0.0
    %450 = vmatprep.subr.mxu0 0.0
    %451 = vmatpush1.msra.mxu0 0.0
    %452 = vmatprep.subr.mxu0 0.0
    %453 = vmatpush1.msra.mxu0 0.0
    %454 = vmatprep.subr.mxu0 0.0
    %455 = vmatpush1.msra.mxu0 0.0
    %456 = vmatprep.subr.mxu0 0.0
    %457 = vmatpush1.msra.mxu0 0.0
    %458 = vmatprep.subr.mxu0 0.0
    %459 = vmatpush1.msra.mxu0 0.0
    %460 = vmatprep.subr.mxu0 0.0
    %461 = vmatpush1.msra.mxu0 0.0
    %462 = vmatprep.subr.mxu0 0.0
    %463 = vmatpush1.msra.mxu0 0.0
    %464 = vmatprep.mubr.f32.mxu0 0.0
    %465 = vmatmul.mubr.f32.gmra.mrb[0].mxu0 %v368
    %v466 = vpop.f32.mrb[0].mxu0
    %v467 = vadd.f32 0.0, %v466
    %v468 = vpop.f32.mrb[0].mxu0
    %469 = vmatprep.mubr.f32.mxu0 0.0
    %470 = vmatmul.mubr.f32.gmra.mrb[0].mxu0 %v369
    %v471 = vpop.f32.mrb[0].mxu0
    %v472 = vadd.f32 0.0, %v471
    %v473 = vpop.f32.mrb[0].mxu0
    %474 = vmatprep.mubr.f32.mxu0 0.0
    %475 = vmatmul.mubr.f32.gmra.mrb[0].mxu0 %v370
    %v476 = vpop.f32.mrb[0].mxu0
    %v477 = vadd.f32 0.0, %v476
    %v478 = vpop.f32.mrb[0].mxu0
    %479 = vmatprep.mubr.f32.mxu0 0.0
    %480 = vmatmul.mubr.f32.gmra.mrb[0].mxu0 %v371
    %v481 = vpop.f32.mrb[0].mxu0
    %v482 = vadd.f32 0.0, %v481
    %v483 = vpop.f32.mrb[0].mxu0
    %484 = vmatprep.mubr.f32.mxu0 0.0
    %485 = vmatmul.mubr.f32.gmra.mrb[0].mxu0 %v372
    %v486 = vpop.f32.mrb[0].mxu0
    %v487 = vadd.f32 0.0, %v486
    %v488 = vpop.f32.mrb[0].mxu0
    %489 = vmatprep.mubr.f32.mxu0 0.0
    %490 = vmatmul.mubr.f32.gmra.mrb[0].mxu0 %v373
    %v491 = vpop.f32.mrb[0].mxu0
    %v492 = vadd.f32 0.0, %v491
    %v493 = vpop.f32.mrb[0].mxu0
    %494 = vmatprep.mubr.f32.mxu0 0.0
    %495 = vmatmul.mubr.f32.gmra.mrb[0].mxu0 %v374
    %v496 = vpop.f32.mrb[0].mxu0
    %v497 = vadd.f32 0.0, %v496
    %v498 = vpop.f32.mrb[0].mxu0
    %499 = vmatprep.mubr.f32.mxu0 0.0
    %500 = vmatmul.mubr.f32.gmra.mrb[0].mxu0 %v375
    %v501 = vpop.f32.mrb[0].mxu0
    %v502 = vadd.f32 0.0, %v501
    %v503 = vpop.f32.mrb[0].mxu0
    %504 = vmatprep.mubr.f32.mxu0 0.0
    %505 = vmatmul.mubr.f32.gmra.mrb[0].mxu0 %v376
    %v506 = vpop.f32.mrb[0].mxu0
    %v507 = vadd.f32 0.0, %v506
    %v508 = vpop.f32.mrb[0].mxu0
    %509 = vmatprep.mubr.f32.mxu0 0.0
    %510 = vmatmul.mubr.f32.gmra.mrb[0].mxu0 %v377
    %v511 = vpop.f32.mrb[0].mxu0
    %v512 = vadd.f32 0.0, %v511
    %v513 = vpop.f32.mrb[0].mxu0
    %514 = vmatprep.mubr.f32.mxu0 0.0
    %515 = vmatmul.mubr.f32.gmra.mrb[0].mxu0 %v378
    %v516 = vpop.f32.mrb[0].mxu0
    %v517 = vadd.f32 0.0, %v516
    %v518 = vpop.f32.mrb[0].mxu0
    %519 = vmatprep.mubr.f32.mxu0 0.0
    %520 = vmatmul.mubr.f32.gmra.mrb[0].mxu0 %v379
    %v521 = vpop.f32.mrb[0].mxu0
    %v522 = vadd.f32 0.0, %v521
    %v523 = vpop.f32.mrb[0].mxu0
    %524 = vmatprep.mubr.f32.mxu0 0.0
    %525 = vmatmul.mubr.f32.gmra.mrb[0].mxu0 %v380
    %v526 = vpop.f32.mrb[0].mxu0
    %v527 = vadd.f32 0.0, %v526
    %v528 = vpop.f32.mrb[0].mxu0
    %529 = vmatprep.mubr.f32.mxu0 0.0
    %530 = vmatmul.mubr.f32.gmra.mrb[0].mxu0 %v381
    %v531 = vpop.f32.mrb[0].mxu0
    %v532 = vadd.f32 0.0, %v531
    %v533 = vpop.f32.mrb[0].mxu0
    %534 = vmatprep.mubr.f32.mxu0 0.0
    %535 = vmatmul.mubr.f32.gmra.mrb[0].mxu0 %v382
    %v536 = vpop.f32.mrb[0].mxu0
    %v537 = vadd.f32 0.0, %v536
    %v538 = vpop.f32.mrb[0].mxu0
    %539 = vmatprep.mubr.f32.mxu0 0.0
    %540 = vmatmul.mubr.f32.gmra.mrb[0].mxu0 %v383
    %v541 = vpop.f32.mrb[0].mxu0
    %v542 = vadd.f32 0.0, %v541
    %v543 = vpop.f32.mrb[0].mxu0
    %544 = vdwg.mxu0
    %545 = vmatprep.subr.mxu0 0.0
    %546 = vmatpush1.msra.mxu0 %v352
    %547 = vmatprep.subr.mxu0 0.0
    %548 = vmatpush1.msra.mxu0 %v353
    %549 = vmatprep.subr.mxu0 0.0
    %550 = vmatpush1.msra.mxu0 %v354
    %551 = vmatprep.subr.mxu0 0.0
    %552 = vmatpush1.msra.mxu0 %v355
    %553 = vmatprep.subr.mxu0 0.0
    %554 = vmatpush1.msra.mxu0 %v356
    %555 = vmatprep.subr.mxu0 0.0
    %556 = vmatpush1.msra.mxu0 %v357
    %557 = vmatprep.subr.mxu0 0.0
    %558 = vmatpush1.msra.mxu0 %v358
    %559 = vmatprep.subr.mxu0 0.0
    %560 = vmatpush1.msra.mxu0 %v359
    %561 = vmatprep.subr.mxu0 0.0
    %562 = vmatpush1.msra.mxu0 %v360
    %563 = vmatprep.subr.mxu0 0.0
    %564 = vmatpush1.msra.mxu0 %v361
    %565 = vmatprep.subr.mxu0 0.0
    %566 = vmatpush1.msra.mxu0 %v362
    %567 = vmatprep.subr.mxu0 0.0
    %568 = vmatpush1.msra.mxu0 %v363
    %569 = vmatprep.subr.mxu0 0.0
    %570 = vmatpush1.msra.mxu0 %v364
    %571 = vmatprep.subr.mxu0 0.0
    %572 = vmatpush1.msra.mxu0 %v365
    %573 = vmatprep.subr.mxu0 0.0
    %574 = vmatpush1.msra.mxu0 %v366
    %575 = vmatprep.subr.mxu0 0.0
    %576 = vmatpush1.msra.mxu0 %v367
    %577 = vmatprep.subr.mxu0 0.0
    %578 = vmatpush1.msra.mxu0 0.0
    %579 = vmatprep.subr.mxu0 0.0
    %580 = vmatpush1.msra.mxu0 0.0
    %581 = vmatprep.subr.mxu0 0.0
    %582 = vmatpush1.msra.mxu0 0.0
    %583 = vmatprep.subr.mxu0 0.0
    %584 = vmatpush1.msra.mxu0 0.0
    %585 = vmatprep.subr.mxu0 0.0
    %586 = vmatpush1.msra.mxu0 0.0
    %587 = vmatprep.subr.mxu0 0.0
    %588 = vmatpush1.msra.mxu0 0.0
    %589 = vmatprep.subr.mxu0 0.0
    %590 = vmatpush1.msra.mxu0 0.0
    %591 = vmatprep.subr.mxu0 0.0
    %592 = vmatpush1.msra.mxu0 0.0
    %593 = vmatprep.subr.mxu0 0.0
    %594 = vmatpush1.msra.mxu0 0.0
    %595 = vmatprep.subr.mxu0 0.0
    %596 = vmatpush1.msra.mxu0 0.0
    %597 = vmatprep.subr.mxu0 0.0
    %598 = vmatpush1.msra.mxu0 0.0
    %599 = vmatprep.subr.mxu0 0.0
    %600 = vmatpush1.msra.mxu0 0.0
    %601 = vmatprep.subr.mxu0 0.0
    %602 = vmatpush1.msra.mxu0 0.0
    %603 = vmatprep.subr.mxu0 0.0
    %604 = vmatpush1.msra.mxu0 0.0
    %605 = vmatprep.subr.mxu0 0.0
    %606 = vmatpush1.msra.mxu0 0.0
    %607 = vmatprep.subr.mxu0 0.0
    %608 = vmatpush1.msra.mxu0 0.0
    %609 = vmatprep.mubr.f32.mxu0 0.0
    %610 = vmatmul.mubr.f32.gmra.mrb[0].mxu0 %v336
    %v611 = vpop.f32.mrb[0].mxu0
    %v612 = vadd.f32 %v467, %v611
    %v613 = vpop.f32.mrb[0].mxu0
    %614 = vmatprep.mubr.f32.mxu0 0.0
    %615 = vmatmul.mubr.f32.gmra.mrb[0].mxu0 %v337
    %v616 = vpop.f32.mrb[0].mxu0
    %v617 = vadd.f32 %v472, %v616
    %v618 = vpop.f32.mrb[0].mxu0
    %619 = vmatprep.mubr.f32.mxu0 0.0
    %620 = vmatmul.mubr.f32.gmra.mrb[0].mxu0 %v338
    %v621 = vpop.f32.mrb[0].mxu0
    %v622 = vadd.f32 %v477, %v621
    %v623 = vpop.f32.mrb[0].mxu0
    %624 = vmatprep.mubr.f32.mxu0 0.0
    %625 = vmatmul.mubr.f32.gmra.mrb[0].mxu0 %v339
    %v626 = vpop.f32.mrb[0].mxu0
    %v627 = vadd.f32 %v482, %v626
    %v628 = vpop.f32.mrb[0].mxu0
    %629 = vmatprep.mubr.f32.mxu0 0.0
    %630 = vmatmul.mubr.f32.gmra.mrb[0].mxu0 %v340
    %v631 = vpop.f32.mrb[0].mxu0
    %v632 = vadd.f32 %v487, %v631
    %v633 = vpop.f32.mrb[0].mxu0
    %634 = vmatprep.mubr.f32.mxu0 0.0
    %635 = vmatmul.mubr.f32.gmra.mrb[0].mxu0 %v341
    %v636 = vpop.f32.mrb[0].mxu0
    %v637 = vadd.f32 %v492, %v636
    %v638 = vpop.f32.mrb[0].mxu0
    %639 = vmatprep.mubr.f32.mxu0 0.0
    %640 = vmatmul.mubr.f32.gmra.mrb[0].mxu0 %v342
    %v641 = vpop.f32.mrb[0].mxu0
    %v642 = vadd.f32 %v497, %v641
    %v643 = vpop.f32.mrb[0].mxu0
    %644 = vmatprep.mubr.f32.mxu0 0.0
    %645 = vmatmul.mubr.f32.gmra.mrb[0].mxu0 %v343
    %v646 = vpop.f32.mrb[0].mxu0
    %v647 = vadd.f32 %v502, %v646
    %v648 = vpop.f32.mrb[0].mxu0
    %649 = vmatprep.mubr.f32.mxu0 0.0
    %650 = vmatmul.mubr.f32.gmra.mrb[0].mxu0 %v344
    %v651 = vpop.f32.mrb[0].mxu0
    %v652 = vadd.f32 %v507, %v651
    %v653 = vpop.f32.mrb[0].mxu0
    %654 = vmatprep.mubr.f32.mxu0 0.0
    %655 = vmatmul.mubr.f32.gmra.mrb[0].mxu0 %v345
    %v656 = vpop.f32.mrb[0].mxu0
    %v657 = vadd.f32 %v512, %v656
    %v658 = vpop.f32.mrb[0].mxu0
    %659 = vmatprep.mubr.f32.mxu0 0.0
    %660 = vmatmul.mubr.f32.gmra.mrb[0].mxu0 %v346
    %v661 = vpop.f32.mrb[0].mxu0
    %v662 = vadd.f32 %v517, %v661
    %v663 = vpop.f32.mrb[0].mxu0
    %664 = vmatprep.mubr.f32.mxu0 0.0
    %665 = vmatmul.mubr.f32.gmra.mrb[0].mxu0 %v347
    %v666 = vpop.f32.mrb[0].mxu0
    %v667 = vadd.f32 %v522, %v666
    %v668 = vpop.f32.mrb[0].mxu0
    %669 = vmatprep.mubr.f32.mxu0 0.0
    %670 = vmatmul.mubr.f32.gmra.mrb[0].mxu0 %v348
    %v671 = vpop.f32.mrb[0].mxu0
    %v672 = vadd.f32 %v527, %v671
    %v673 = vpop.f32.mrb[0].mxu0
    %674 = vmatprep.mubr.f32.mxu0 0.0
    %675 = vmatmul.mubr.f32.gmra.mrb[0].mxu0 %v349
    %v676 = vpop.f32.mrb[0].mxu0
    %v677 = vadd.f32 %v532, %v676
    %v678 = vpop.f32.mrb[0].mxu0
    %679 = vmatprep.mubr.f32.mxu0 0.0
    %680 = vmatmul.mubr.f32.gmra.mrb[0].mxu0 %v350
    %v681 = vpop.f32.mrb[0].mxu0
    %v682 = vadd.f32 %v537, %v681
    %v683 = vpop.f32.mrb[0].mxu0
    %684 = vmatprep.mubr.f32.mxu0 0.0
    %685 = vmatmul.mubr.f32.gmra.mrb[0].mxu0 %v351
    %v686 = vpop.f32.mrb[0].mxu0
    %v687 = vadd.f32 %v542, %v686
    %v688 = vpop.f32.mrb[0].mxu0
    %689 = vdwg.mxu0
    %v690 = vld [vmem:[%s5] sm:$0x1]
    %v692 = vlaneseq
    %v693 = vshrl.u32 %v692, 7
    %v694 = vsub.s32 0, %v693
    %v695 = vrot.slane %v690, %v694
    %v697 = vadd.f32 %v612, %v695
    %v698 = vadd.f32 %v617, %v695
    %v699 = vadd.f32 %v622, %v695
    %v700 = vadd.f32 %v627, %v695
    %v701 = vadd.f32 %v632, %v695
    %v702 = vadd.f32 %v637, %v695
    %v703 = vadd.f32 %v642, %v695
    %v704 = vadd.f32 %v647, %v695
    %v705 = vadd.f32 %v652, %v695
    %v706 = vadd.f32 %v657, %v695
    %v707 = vadd.f32 %v662, %v695
    %v708 = vadd.f32 %v667, %v695
    %v709 = vadd.f32 %v672, %v695
    %v710 = vadd.f32 %v677, %v695
    %v711 = vadd.f32 %v682, %v695
    %v712 = vadd.f32 %v687, %v695
    %v713 = vlaneseq
    %v714 = vand.u32 %v713, 127
    %vm715 = vcmp.lt.s32.totalorder %v714, 24
    %v716 = vsel %vm715, %v697, -1e+30
    %v717 = vsel %vm715, %v698, -1e+30
    %v718 = vsel %vm715, %v699, -1e+30
    %v719 = vsel %vm715, %v700, -1e+30
    %v720 = vsel %vm715, %v701, -1e+30
    %v721 = vsel %vm715, %v702, -1e+30
    %v722 = vsel %vm715, %v703, -1e+30
    %v723 = vsel %vm715, %v704, -1e+30
    %v724 = vsel %vm715, %v705, -1e+30
    %v725 = vsel %vm715, %v706, -1e+30
    %v726 = vsel %vm715, %v707, -1e+30
    %v727 = vsel %vm715, %v708, -1e+30
    %v728 = vsel %vm715, %v709, -1e+30
    %v729 = vsel %vm715, %v710, -1e+30
    %v730 = vsel %vm715, %v711, -1e+30
    %v731 = vsel %vm715, %v712, -1e+30
    %732 = vmax.xlane.f32.xlu0 %v716
    %v733 = vpop.xlane.xlu0 %732
    %734 = vmax.xlane.f32.xlu0 %v717
    %v735 = vpop.xlane.xlu0 %734
    %736 = vmax.xlane.f32.xlu0 %v718
    %v737 = vpop.xlane.xlu0 %736
    %738 = vmax.xlane.f32.xlu0 %v719
    %v739 = vpop.xlane.xlu0 %738
    %740 = vmax.xlane.f32.xlu0 %v720
    %v741 = vpop.xlane.xlu0 %740
    %742 = vmax.xlane.f32.xlu0 %v721
    %v743 = vpop.xlane.xlu0 %742
    %744 = vmax.xlane.f32.xlu0 %v722
    %v745 = vpop.xlane.xlu0 %744
    %746 = vmax.xlane.f32.xlu0 %v723
    %v747 = vpop.xlane.xlu0 %746
    %748 = vmax.xlane.f32.xlu0 %v724
    %v749 = vpop.xlane.xlu0 %748
    %750 = vmax.xlane.f32.xlu0 %v725
    %v751 = vpop.xlane.xlu0 %750
    %752 = vmax.xlane.f32.xlu0 %v726
    %v753 = vpop.xlane.xlu0 %752
    %754 = vmax.xlane.f32.xlu0 %v727
    %v755 = vpop.xlane.xlu0 %754
    %756 = vmax.xlane.f32.xlu0 %v728
    %v757 = vpop.xlane.xlu0 %756
    %758 = vmax.xlane.f32.xlu0 %v729
    %v759 = vpop.xlane.xlu0 %758
    %760 = vmax.xlane.f32.xlu0 %v730
    %v761 = vpop.xlane.xlu0 %760
    %762 = vmax.xlane.f32.xlu0 %v731
    %v763 = vpop.xlane.xlu0 %762
    %v764 = vsub.f32 %v716, %v733
    %v765 = vsub.f32 %v717, %v735
    %v766 = vsub.f32 %v718, %v737
    %v767 = vsub.f32 %v719, %v739
    %v768 = vsub.f32 %v720, %v741
    %v769 = vsub.f32 %v721, %v743
    %v770 = vsub.f32 %v722, %v745
    %v771 = vsub.f32 %v723, %v747
    %v772 = vsub.f32 %v724, %v749
    %v773 = vsub.f32 %v725, %v751
    %v774 = vsub.f32 %v726, %v753
    %v775 = vsub.f32 %v727, %v755
    %v776 = vsub.f32 %v728, %v757
    %v777 = vsub.f32 %v729, %v759
    %v778 = vsub.f32 %v730, %v761
    %v779 = vsub.f32 %v731, %v763
    %v780 = vmul.f32 %v764, 1.442695
    %v781 = vpow.pop %v780
    %v782 = vmul.f32 %v765, 1.442695
    %v783 = vpow.pop %v782
    %v784 = vmul.f32 %v766, 1.442695
    %v785 = vpow.pop %v784
    %v786 = vmul.f32 %v767, 1.442695
    %v787 = vpow.pop %v786
    %v788 = vmul.f32 %v768, 1.442695
    %v789 = vpow.pop %v788
    %v790 = vmul.f32 %v769, 1.442695
    %v791 = vpow.pop %v790
    %v792 = vmul.f32 %v770, 1.442695
    %v793 = vpow.pop %v792
    %v794 = vmul.f32 %v771, 1.442695
    %v795 = vpow.pop %v794
    %v796 = vmul.f32 %v772, 1.442695
    %v797 = vpow.pop %v796
    %v798 = vmul.f32 %v773, 1.442695
    %v799 = vpow.pop %v798
    %v800 = vmul.f32 %v774, 1.442695
    %v801 = vpow.pop %v800
    %v802 = vmul.f32 %v775, 1.442695
    %v803 = vpow.pop %v802
    %v804 = vmul.f32 %v776, 1.442695
    %v805 = vpow.pop %v804
    %v806 = vmul.f32 %v777, 1.442695
    %v807 = vpow.pop %v806
    %v808 = vmul.f32 %v778, 1.442695
    %v809 = vpow.pop %v808
    %v810 = vmul.f32 %v779, 1.442695
    %v811 = vpow.pop %v810
    %812 = vadd.xlane.f32.xlu0 %v781
    %v813 = vpop.xlane.xlu0 %812
    %814 = vadd.xlane.f32.xlu0 %v783
    %v815 = vpop.xlane.xlu0 %814
    %816 = vadd.xlane.f32.xlu0 %v785
    %v817 = vpop.xlane.xlu0 %816
    %818 = vadd.xlane.f32.xlu0 %v787
    %v819 = vpop.xlane.xlu0 %818
    %820 = vadd.xlane.f32.xlu0 %v789
    %v821 = vpop.xlane.xlu0 %820
    %822 = vadd.xlane.f32.xlu0 %v791
    %v823 = vpop.xlane.xlu0 %822
    %824 = vadd.xlane.f32.xlu0 %v793
    %v825 = vpop.xlane.xlu0 %824
    %826 = vadd.xlane.f32.xlu0 %v795
    %v827 = vpop.xlane.xlu0 %826
    %828 = vadd.xlane.f32.xlu0 %v797
    %v829 = vpop.xlane.xlu0 %828
    %830 = vadd.xlane.f32.xlu0 %v799
    %v831 = vpop.xlane.xlu0 %830
    %832 = vadd.xlane.f32.xlu0 %v801
    %v833 = vpop.xlane.xlu0 %832
    %834 = vadd.xlane.f32.xlu0 %v803
    %v835 = vpop.xlane.xlu0 %834
    %836 = vadd.xlane.f32.xlu0 %v805
    %v837 = vpop.xlane.xlu0 %836
    %838 = vadd.xlane.f32.xlu0 %v807
    %v839 = vpop.xlane.xlu0 %838
    %840 = vadd.xlane.f32.xlu0 %v809
    %v841 = vpop.xlane.xlu0 %840
    %842 = vadd.xlane.f32.xlu0 %v811
    %v843 = vpop.xlane.xlu0 %842
    %v844 = vlog2.pop %v813
    %v845 = vmul.f32 %v844, 0.6931472
    %v846 = vlog2.pop %v815
    %v847 = vmul.f32 %v846, 0.6931472
    %v848 = vlog2.pop %v817
    %v849 = vmul.f32 %v848, 0.6931472
    %v850 = vlog2.pop %v819
    %v851 = vmul.f32 %v850, 0.6931472
    %v852 = vlog2.pop %v821
    %v853 = vmul.f32 %v852, 0.6931472
    %v854 = vlog2.pop %v823
    %v855 = vmul.f32 %v854, 0.6931472
    %v856 = vlog2.pop %v825
    %v857 = vmul.f32 %v856, 0.6931472
    %v858 = vlog2.pop %v827
    %v859 = vmul.f32 %v858, 0.6931472
    %v860 = vlog2.pop %v829
    %v861 = vmul.f32 %v860, 0.6931472
    %v862 = vlog2.pop %v831
    %v863 = vmul.f32 %v862, 0.6931472
    %v864 = vlog2.pop %v833
    %v865 = vmul.f32 %v864, 0.6931472
    %v866 = vlog2.pop %v835
    %v867 = vmul.f32 %v866, 0.6931472
    %v868 = vlog2.pop %v837
    %v869 = vmul.f32 %v868, 0.6931472
    %v870 = vlog2.pop %v839
    %v871 = vmul.f32 %v870, 0.6931472
    %v872 = vlog2.pop %v841
    %v873 = vmul.f32 %v872, 0.6931472
    %v874 = vlog2.pop %v843
    %v875 = vmul.f32 %v874, 0.6931472
    %v876 = vsub.f32 %v764, %v845
    %v877 = vsub.f32 %v765, %v847
    %v878 = vsub.f32 %v766, %v849
    %v879 = vsub.f32 %v767, %v851
    %v880 = vsub.f32 %v768, %v853
    %v881 = vsub.f32 %v769, %v855
    %v882 = vsub.f32 %v770, %v857
    %v883 = vsub.f32 %v771, %v859
    %v884 = vsub.f32 %v772, %v861
    %v885 = vsub.f32 %v773, %v863
    %v886 = vsub.f32 %v774, %v865
    %v887 = vsub.f32 %v775, %v867
    %v888 = vsub.f32 %v776, %v869
    %v889 = vsub.f32 %v777, %v871
    %v890 = vsub.f32 %v778, %v873
    %v891 = vsub.f32 %v779, %v875
    %892 = vst [vmem:[%s6] sm:$0xff] %v876
    %893 = vst [vmem:[%s6 + $0x8] sm:$0xff] %v877
    %894 = vst [vmem:[%s6 + $0x10] sm:$0xff] %v878
    %895 = vst [vmem:[%s6 + $0x18] sm:$0xff] %v879
    %896 = vst [vmem:[%s6 + $0x20] sm:$0xff] %v880
    %897 = vst [vmem:[%s6 + $0x28] sm:$0xff] %v881
    %898 = vst [vmem:[%s6 + $0x30] sm:$0xff] %v882
    %899 = vst [vmem:[%s6 + $0x38] sm:$0xff] %v883
    %900 = vst [vmem:[%s6 + $0x40] sm:$0xff] %v884
    %901 = vst [vmem:[%s6 + $0x48] sm:$0xff] %v885
    %902 = vst [vmem:[%s6 + $0x50] sm:$0xff] %v886
    %903 = vst [vmem:[%s6 + $0x58] sm:$0xff] %v887
    %904 = vst [vmem:[%s6 + $0x60] sm:$0xff] %v888
    %905 = vst [vmem:[%s6 + $0x68] sm:$0xff] %v889
    %906 = vst [vmem:[%s6 + $0x70] sm:$0xff] %v890
    %907 = vst [vmem:[%s6 + $0x78] sm:$0xff] %v891
  $region33: #{gsgnet_forward.3} parent=0 // pred_fallthru
    _
  // Predicated region
  $region34: #{gsgnet_forward.3} parent=0 // pred_check
    _
  $region35: #{gsgnet_forward.3} parent=0 // pred_check_branch
    %909 = sbr.rel (0) target = $region37
  $region36: #{gsgnet_forward.3} parent=0 // pred_region
    _
  $region37: #{gsgnet_forward.3} parent=0 // pred_fallthru
    _
  // Predicated region
  $region38: #{gsgnet_forward.3} parent=0 // pred_check
    _
  $region39: #{gsgnet_forward.3} parent=0 // pred_check_branch
    %911 = sbr.rel (0) target = $region41
  $region40: #{gsgnet_forward.3} parent=0 // pred_region
    _
  $region41: #{gsgnet_forward.3} parent=0 // pred_fallthru
    _

// kernel: gsgnet_forward.2
$region0: #{gsgnet_forward.2}
  #allocation0 [shape = 'u32[]', space=smem, size = 0x4, offset = 0x4, fixed_abs, tag = 'smem constant byte address 0x4 - core index']
  #allocation1 [shape = 'u32[144,128]{1,0:T(1,128)}', space=vmem, size = 0x12000, scoped, tag = 'internal scratch']
  #allocation2 [shape = 'f32[128,128]{1,0:T(8,128)}', space=vmem, size = 0x10000, scoped, tag = 'scratch operand']
  %s0 = inlined_call_operand.hbm [shape: bf16[128,128], index: 0, kind: input, shape index: {}]
  %s1 = inlined_call_operand.hbm [shape: bf16[128,128], index: 1, kind: input, shape index: {}, may-alias: {1,2}]
  %s2 = inlined_call_operand.hbm [shape: bf16[128,128], index: 2, kind: input, shape index: {}, may-alias: {1,2}]
  %s3 = inlined_call_operand.hbm [shape: f32[128,128], index: 3, kind: input, shape index: {}]
  %s4 = inlined_call_operand.hbm [shape: f32[128,128], index: 4, kind: input, shape index: {}]
  %s5 = inlined_call_operand.vmem [shape: f32[1,128], index: 5, kind: input, shape index: {}]
  %s6 = inlined_call_operand.vmem [shape: bf16[128,128], index: 6, kind: output, shape index: {}]
  %s7 = sld [smem:[#allocation0]]
  $region62: #{gsgnet_forward.2} parent=0
    _
  %s9 = ssub.s32 1, %s7
  %s10 = scalar_select 0, %s9, %s7
  $region1: #{gsgnet_forward.2} parent=0
    #allocation3 [shape = 'u8[32768]{0}', space=vmem, size = 0x8000, scoped, tag = 'input window, operand 0, single buffered']
    #allocation4 [shape = 's32[1]{0}', space=sflag, size = 0x4, scoped, tag = 'scoped memory for gsgnet_forward.2']
    #allocation5 [shape = 'u8[32768]{0}', space=vmem, size = 0x8000, scoped, tag = 'input window, operand 1, single buffered']
    #allocation6 [shape = 's32[1]{0}', space=sflag, size = 0x4, scoped, tag = 'scoped memory for gsgnet_forward.2']
    #allocation7 [shape = 'u8[32768]{0}', space=vmem, size = 0x8000, scoped, tag = 'input window, operand 2, single buffered']
    #allocation8 [shape = 'u8[65536]{0}', space=vmem, size = 0x10000, scoped, tag = 'input window, operand 3, single buffered']
    #allocation9 [shape = 's32[1]{0}', space=sflag, size = 0x4, scoped, tag = 'scoped memory for gsgnet_forward.2']
    #allocation10 [shape = 'u8[65536]{0}', space=vmem, size = 0x10000, scoped, tag = 'input window, operand 4, single buffered']
    %11 = vsyncpa [#allocation4], 0
    %12 = vsyncpa [#allocation6], 0
    %13 = vsyncpa [#allocation9], 0
    // Predicated region
    $region2: #{gsgnet_forward.2} parent=1 // pred_check
      _
    $region3: #{gsgnet_forward.2} parent=1 // pred_check_branch
      %15 = sbr.rel (0) target = $region5
    $region4: #{gsgnet_forward.2} parent=1 // pred_region
      %s17 = ssub.s32 1024, 1024
      %18 = vsyncadd [#allocation4], %s17
      %s19 = sshll.u32 [#allocation3], 4
      %s20 = int_to_ptr.vmem [resolvable:$true] %s19
      %25 = dma.hbm_to_vmem [thread:$0]  %s0, 1024, %s20, [#allocation4], 64, 64, 4
    $region5: #{gsgnet_forward.2} parent=1 // pred_fallthru
      _
    // Predicated region
    $region6: #{gsgnet_forward.2} parent=1 // pred_check
      _
    $region7: #{gsgnet_forward.2} parent=1 // pred_check_branch
      %27 = sbr.rel (0) target = $region9
    $region8: #{gsgnet_forward.2} parent=1 // pred_region
      %s29 = ssub.s32 1024, 1024
      %30 = vsyncadd [#allocation6], %s29
      %s31 = sshll.u32 [#allocation5], 4
      %s32 = int_to_ptr.vmem [resolvable:$true] %s31
      %37 = dma.hbm_to_vmem [thread:$0]  %s1, 1024, %s32, [#allocation6], 64, 64, 4
    $region9: #{gsgnet_forward.2} parent=1 // pred_fallthru
      _
    // Predicated region
    $region10: #{gsgnet_forward.2} parent=1 // pred_check
      _
    $region11: #{gsgnet_forward.2} parent=1 // pred_check_branch
      %39 = sbr.rel (0) target = $region13
    $region12: #{gsgnet_forward.2} parent=1 // pred_region
      %s41 = ssub.s32 1024, 1024
      %42 = vsyncadd [#allocation6], %s41
      %s43 = sshll.u32 [#allocation7], 4
      %s44 = int_to_ptr.vmem [resolvable:$true] %s43
      %49 = dma.hbm_to_vmem [thread:$0]  %s2, 1024, %s44, [#allocation6], 64, 64, 4
    $region13: #{gsgnet_forward.2} parent=1 // pred_fallthru
      _
    // Predicated region
    $region14: #{gsgnet_forward.2} parent=1 // pred_check
      _
    $region15: #{gsgnet_forward.2} parent=1 // pred_check_branch
      %51 = sbr.rel (0) target = $region17
    $region16: #{gsgnet_forward.2} parent=1 // pred_region
      %s53 = ssub.s32 2048, 2048
      %54 = vsyncadd [#allocation9], %s53
      %s55 = sshll.u32 [#allocation8], 4
      %s56 = int_to_ptr.vmem [resolvable:$true] %s55
      %61 = dma.hbm_to_vmem [thread:$0]  %s3, 2048, %s56, [#allocation9], 128, 128, 8
    $region17: #{gsgnet_forward.2} parent=1 // pred_fallthru
      _
    // Predicated region
    $region18: #{gsgnet_forward.2} parent=1 // pred_check
      _
    $region19: #{gsgnet_forward.2} parent=1 // pred_check_branch
      %63 = sbr.rel (0) target = $region21
    $region20: #{gsgnet_forward.2} parent=1 // pred_region
      %s65 = ssub.s32 2048, 2048
      %66 = vsyncadd [#allocation9], %s65
      %s67 = sshll.u32 [#allocation10], 4
      %s68 = int_to_ptr.vmem [resolvable:$true] %s67
      %73 = dma.hbm_to_vmem [thread:$0]  %s4, 2048, %s68, [#allocation9], 128, 128, 8
    $region21: #{gsgnet_forward.2} parent=1 // pred_fallthru
      _
    // Predicated region
    $region22: #{gsgnet_forward.2} parent=1 // pred_check
      _
    $region23: #{gsgnet_forward.2} parent=1 // pred_check_branch
      %75 = sbr.rel (0) target = $region25
    $region24: #{gsgnet_forward.2} parent=1 // pred_region
      _
    $region25: #{gsgnet_forward.2} parent=1 // pred_fallthru
      _
    // Predicated region
    $region26: #{gsgnet_forward.2} parent=1 // pred_check
      _
    $region27: #{gsgnet_forward.2} parent=1 // pred_check_branch
      %77 = sbr.rel (0) target = $region29
    $region28: #{gsgnet_forward.2} parent=1 // pred_region
      %78 = dma.done [#allocation4], 1024
    $region29: #{gsgnet_forward.2} parent=1 // pred_fallthru
      _
    // Predicated region
    $region30: #{gsgnet_forward.2} parent=1 // pred_check
      _
    $region31: #{gsgnet_forward.2} parent=1 // pred_check_branch
      %80 = sbr.rel (0) target = $region33
    $region32: #{gsgnet_forward.2} parent=1 // pred_region
      %81 = dma.done [#allocation6], 1024
    $region33: #{gsgnet_forward.2} parent=1 // pred_fallthru
      _
    // Predicated region
    $region34: #{gsgnet_forward.2} parent=1 // pred_check
      _
    $region35: #{gsgnet_forward.2} parent=1 // pred_check_branch
      %83 = sbr.rel (0) target = $region37
    $region36: #{gsgnet_forward.2} parent=1 // pred_region
      %84 = dma.done [#allocation6], 1024
    $region37: #{gsgnet_forward.2} parent=1 // pred_fallthru
      _
    // Predicated region
    $region38: #{gsgnet_forward.2} parent=1 // pred_check
      _
    $region39: #{gsgnet_forward.2} parent=1 // pred_check_branch
      %86 = sbr.rel (0) target = $region41
    $region40: #{gsgnet_forward.2} parent=1 // pred_region
      %87 = dma.done [#allocation9], 2048
    $region41: #{gsgnet_forward.2} parent=1 // pred_fallthru
      _
    // Predicated region
    $region42: #{gsgnet_forward.2} parent=1 // pred_check
      _
    $region43: #{gsgnet_forward.2} parent=1 // pred_check_branch
      %89 = sbr.rel (0) target = $region45
    $region44: #{gsgnet_forward.2} parent=1 // pred_region
      %90 = dma.done [#allocation9], 2048
    $region45: #{gsgnet_forward.2} parent=1 // pred_fallthru
      _
    %p92 = scmp.eq.s32.totalorder 0, 0
    // Predicated region
    $region46: #{gsgnet_forward.2} parent=1 // pred_check
      %p93 = pneg %p92
    $region47: #{gsgnet_forward.2} parent=1 // pred_check_branch
      %95 = sbr.rel (%p93) target = $region49
    $region48: #{gsgnet_forward.2} parent=1 // pred_region
      %96 = vst [vmem:[#allocation2] sm:$0xff] 0.0
      %97 = vst [vmem:[#allocation2 + $0x8] sm:$0xff] 0.0
      %98 = vst [vmem:[#allocation2 + $0x10] sm:$0xff] 0.0
      %99 = vst [vmem:[#allocation2 + $0x18] sm:$0xff] 0.0
      %100 = vst [vmem:[#allocation2 + $0x20] sm:$0xff] 0.0
      %101 = vst [vmem:[#allocation2 + $0x28] sm:$0xff] 0.0
      %102 = vst [vmem:[#allocation2 + $0x30] sm:$0xff] 0.0
      %103 = vst [vmem:[#allocation2 + $0x38] sm:$0xff] 0.0
      %104 = vst [vmem:[#allocation2 + $0x40] sm:$0xff] 0.0
      %105 = vst [vmem:[#allocation2 + $0x48] sm:$0xff] 0.0
      %106 = vst [vmem:[#allocation2 + $0x50] sm:$0xff] 0.0
      %107 = vst [vmem:[#allocation2 + $0x58] sm:$0xff] 0.0
      %108 = vst [vmem:[#allocation2 + $0x60] sm:$0xff] 0.0
      %109 = vst [vmem:[#allocation2 + $0x68] sm:$0xff] 0.0
      %110 = vst [vmem:[#allocation2 + $0x70] sm:$0xff] 0.0
      %111 = vst [vmem:[#allocation2 + $0x78] sm:$0xff] 0.0
    $region49: #{gsgnet_forward.2} parent=1 // pred_fallthru
      _
    %v112 = vld [vmem:[#allocation2] sm:$0xff]
    %v113 = vld [vmem:[#allocation2 + $0x8] sm:$0xff]
    %v114 = vld [vmem:[#allocation2 + $0x10] sm:$0xff]
    %v115 = vld [vmem:[#allocation2 + $0x18] sm:$0xff]
    %v116 = vld [vmem:[#allocation2 + $0x20] sm:$0xff]
    %v117 = vld [vmem:[#allocation2 + $0x28] sm:$0xff]
    %v118 = vld [vmem:[#allocation2 + $0x30] sm:$0xff]
    %v119 = vld [vmem:[#allocation2 + $0x38] sm:$0xff]
    %v120 = vld [vmem:[#allocation2 + $0x40] sm:$0xff]
    %v121 = vld [vmem:[#allocation2 + $0x48] sm:$0xff]
    %v122 = vld [vmem:[#allocation2 + $0x50] sm:$0xff]
    %v123 = vld [vmem:[#allocation2 + $0x58] sm:$0xff]
    %v124 = vld [vmem:[#allocation2 + $0x60] sm:$0xff]
    %v125 = vld [vmem:[#allocation2 + $0x68] sm:$0xff]
    %v126 = vld [vmem:[#allocation2 + $0x70] sm:$0xff]
    %v127 = vld [vmem:[#allocation2 + $0x78] sm:$0xff]
    %v128 = vld [vmem:[#allocation3] sm:$0xf]
    %v129 = vld [vmem:[#allocation3 + $0x4] sm:$0xf]
    %v130 = vld [vmem:[#allocation3 + $0x8] sm:$0xf]
    %v131 = vld [vmem:[#allocation3 + $0xc] sm:$0xf]
    %v132 = vld [vmem:[#allocation3 + $0x10] sm:$0xf]
    %v133 = vld [vmem:[#allocation3 + $0x14] sm:$0xf]
    %v134 = vld [vmem:[#allocation3 + $0x18] sm:$0xf]
    %v135 = vld [vmem:[#allocation3 + $0x1c] sm:$0xf]
    %v136 = vld [vmem:[#allocation3 + $0x20] sm:$0xf]
    %v137 = vld [vmem:[#allocation3 + $0x24] sm:$0xf]
    %v138 = vld [vmem:[#allocation3 + $0x28] sm:$0xf]
    %v139 = vld [vmem:[#allocation3 + $0x2c] sm:$0xf]
    %v140 = vld [vmem:[#allocation3 + $0x30] sm:$0xf]
    %v141 = vld [vmem:[#allocation3 + $0x34] sm:$0xf]
    %v142 = vld [vmem:[#allocation3 + $0x38] sm:$0xf]
    %v143 = vld [vmem:[#allocation3 + $0x3c] sm:$0xf]
    %v144 = vld [vmem:[#allocation5] sm:$0xf]
    %v145 = vld [vmem:[#allocation5 + $0x4] sm:$0xf]
    %v146 = vld [vmem:[#allocation5 + $0x8] sm:$0xf]
    %v147 = vld [vmem:[#allocation5 + $0xc] sm:$0xf]
    %v148 = vld [vmem:[#allocation5 + $0x10] sm:$0xf]
    %v149 = vld [vmem:[#allocation5 + $0x14] sm:$0xf]
    %v150 = vld [vmem:[#allocation5 + $0x18] sm:$0xf]
    %v151 = vld [vmem:[#allocation5 + $0x1c] sm:$0xf]
    %v152 = vld [vmem:[#allocation5 + $0x20] sm:$0xf]
    %v153 = vld [vmem:[#allocation5 + $0x24] sm:$0xf]
    %v154 = vld [vmem:[#allocation5 + $0x28] sm:$0xf]
    %v155 = vld [vmem:[#allocation5 + $0x2c] sm:$0xf]
    %v156 = vld [vmem:[#allocation5 + $0x30] sm:$0xf]
    %v157 = vld [vmem:[#allocation5 + $0x34] sm:$0xf]
    %v158 = vld [vmem:[#allocation5 + $0x38] sm:$0xf]
    %v159 = vld [vmem:[#allocation5 + $0x3c] sm:$0xf]
    %v176 = vunpack.c.l.b16 %v128
    %v177 = vunpack.c.l.b16 %v129
    %v178 = vunpack.c.l.b16 %v130
    %v179 = vunpack.c.l.b16 %v131
    %v180 = vunpack.c.l.b16 %v132
    %v181 = vunpack.c.l.b16 %v133
    %v182 = vunpack.c.l.b16 %v134
    %v183 = vunpack.c.l.b16 %v135
    %v184 = vunpack.c.l.b16 %v136
    %v185 = vunpack.c.l.b16 %v137
    %v186 = vunpack.c.l.b16 %v138
    %v187 = vunpack.c.l.b16 %v139
    %v188 = vunpack.c.l.b16 %v140
    %v189 = vunpack.c.l.b16 %v141
    %v190 = vunpack.c.l.b16 %v142
    %v191 = vunpack.c.l.b16 %v143
    %v192 = vpack.c.b16 %v177, %v176
    %v193 = vpack.c.b16 %v179, %v178
    %v194 = vpack.c.b16 %v181, %v180
    %v195 = vpack.c.b16 %v183, %v182
    %v196 = vpack.c.b16 %v185, %v184
    %v197 = vpack.c.b16 %v187, %v186
    %v198 = vpack.c.b16 %v189, %v188
    %v199 = vpack.c.b16 %v191, %v190
    %v224 = vunpack.c.l.b16 %v144
    %v225 = vunpack.c.l.b16 %v145
    %v226 = vunpack.c.l.b16 %v146
    %v227 = vunpack.c.l.b16 %v147
    %v228 = vunpack.c.l.b16 %v148
    %v229 = vunpack.c.l.b16 %v149
    %v230 = vunpack.c.l.b16 %v150
    %v231 = vunpack.c.l.b16 %v151
    %v232 = vunpack.c.l.b16 %v152
    %v233 = vunpack.c.l.b16 %v153
    %v234 = vunpack.c.l.b16 %v154
    %v235 = vunpack.c.l.b16 %v155
    %v236 = vunpack.c.l.b16 %v156
    %v237 = vunpack.c.l.b16 %v157
    %v238 = vunpack.c.l.b16 %v158
    %v239 = vunpack.c.l.b16 %v159
    %v240 = vpack.c.b16 %v225, %v224
    %v241 = vpack.c.b16 %v227, %v226
    %v242 = vpack.c.b16 %v229, %v228
    %v243 = vpack.c.b16 %v231, %v230
    %v244 = vpack.c.b16 %v233, %v232
    %v245 = vpack.c.b16 %v235, %v234
    %v246 = vpack.c.b16 %v237, %v236
    %v247 = vpack.c.b16 %v239, %v238
    %256 = vmatprep.subr.bf16.mxu0 0
    %257 = vmatpush1.bf16.msra.mxu0 %v240
    %258 = vmatprep.subr.bf16.mxu0 0
    %259 = vmatpush1.bf16.msra.mxu0 %v241
    %260 = vmatprep.subr.bf16.mxu0 0
    %261 = vmatpush1.bf16.msra.mxu0 %v242
    %262 = vmatprep.subr.bf16.mxu0 0
    %263 = vmatpush1.bf16.msra.mxu0 %v243
    %264 = vmatprep.subr.bf16.mxu0 0
    %265 = vmatpush1.bf16.msra.mxu0 %v244
    %266 = vmatprep.subr.bf16.mxu0 0
    %267 = vmatpush1.bf16.msra.mxu0 %v245
    %268 = vmatprep.subr.bf16.mxu0 0
    %269 = vmatpush1.bf16.msra.mxu0 %v246
    %270 = vmatprep.subr.bf16.mxu0 0
    %271 = vmatpush1.bf16.msra.mxu0 %v247
    %272 = vmatprep.subr.bf16.mxu0 0
    %273 = vmatpush1.bf16.msra.mxu0 0
    %274 = vmatprep.subr.bf16.mxu0 0
    %275 = vmatpush1.bf16.msra.mxu0 0
    %276 = vmatprep.subr.bf16.mxu0 0
    %277 = vmatpush1.bf16.msra.mxu0 0
    %278 = vmatprep.subr.bf16.mxu0 0
    %279 = vmatpush1.bf16.msra.mxu0 0
    %280 = vmatprep.subr.bf16.mxu0 0
    %281 = vmatpush1.bf16.msra.mxu0 0
    %282 = vmatprep.subr.bf16.mxu0 0
    %283 = vmatpush1.bf16.msra.mxu0 0
    %284 = vmatprep.subr.bf16.mxu0 0
    %285 = vmatpush1.bf16.msra.mxu0 0
    %286 = vmatprep.subr.bf16.mxu0 0
    %287 = vmatpush1.bf16.msra.mxu0 0
    %288 = vmatprep.mubr.bf16.mxu0 0
    %289 = vmatmul.mubr.bf16.gmra.mrb[0].mxu0 %v192
    %v290 = vpop.f32.mrb[0].mxu0
    %v291 = vadd.f32 0.0, %v290
    %v292 = vpop.f32.mrb[0].mxu0
    %v293 = vpop.f32.mrb[0].mxu0
    %v294 = vadd.f32 0.0, %v293
    %v295 = vpop.f32.mrb[0].mxu0
    %296 = vmatprep.mubr.bf16.mxu0 0
    %297 = vmatmul.mubr.bf16.gmra.mrb[0].mxu0 %v193
    %v298 = vpop.f32.mrb[0].mxu0
    %v299 = vadd.f32 0.0, %v298
    %v300 = vpop.f32.mrb[0].mxu0
    %v301 = vpop.f32.mrb[0].mxu0
    %v302 = vadd.f32 0.0, %v301
    %v303 = vpop.f32.mrb[0].mxu0
    %304 = vmatprep.mubr.bf16.mxu0 0
    %305 = vmatmul.mubr.bf16.gmra.mrb[0].mxu0 %v194
    %v306 = vpop.f32.mrb[0].mxu0
    %v307 = vadd.f32 0.0, %v306
    %v308 = vpop.f32.mrb[0].mxu0
    %v309 = vpop.f32.mrb[0].mxu0
    %v310 = vadd.f32 0.0, %v309
    %v311 = vpop.f32.mrb[0].mxu0
    %312 = vmatprep.mubr.bf16.mxu0 0
    %313 = vmatmul.mubr.bf16.gmra.mrb[0].mxu0 %v195
    %v314 = vpop.f32.mrb[0].mxu0
    %v315 = vadd.f32 0.0, %v314
    %v316 = vpop.f32.mrb[0].mxu0
    %v317 = vpop.f32.mrb[0].mxu0
    %v318 = vadd.f32 0.0, %v317
    %v319 = vpop.f32.mrb[0].mxu0
    %320 = vmatprep.mubr.bf16.mxu0 0
    %321 = vmatmul.mubr.bf16.gmra.mrb[0].mxu0 %v196
    %v322 = vpop.f32.mrb[0].mxu0
    %v323 = vadd.f32 0.0, %v322
    %v324 = vpop.f32.mrb[0].mxu0
    %v325 = vpop.f32.mrb[0].mxu0
    %v326 = vadd.f32 0.0, %v325
    %v327 = vpop.f32.mrb[0].mxu0
    %328 = vmatprep.mubr.bf16.mxu0 0
    %329 = vmatmul.mubr.bf16.gmra.mrb[0].mxu0 %v197
    %v330 = vpop.f32.mrb[0].mxu0
    %v331 = vadd.f32 0.0, %v330
    %v332 = vpop.f32.mrb[0].mxu0
    %v333 = vpop.f32.mrb[0].mxu0
    %v334 = vadd.f32 0.0, %v333
    %v335 = vpop.f32.mrb[0].mxu0
    %336 = vmatprep.mubr.bf16.mxu0 0
    %337 = vmatmul.mubr.bf16.gmra.mrb[0].mxu0 %v198
    %v338 = vpop.f32.mrb[0].mxu0
    %v339 = vadd.f32 0.0, %v338
    %v340 = vpop.f32.mrb[0].mxu0
    %v341 = vpop.f32.mrb[0].mxu0
    %v342 = vadd.f32 0.0, %v341
    %v343 = vpop.f32.mrb[0].mxu0
    %344 = vmatprep.mubr.bf16.mxu0 0
    %345 = vmatmul.mubr.bf16.gmra.mrb[0].mxu0 %v199
    %v346 = vpop.f32.mrb[0].mxu0
    %v347 = vadd.f32 0.0, %v346
    %v348 = vpop.f32.mrb[0].mxu0
    %v349 = vpop.f32.mrb[0].mxu0
    %v350 = vadd.f32 0.0, %v349
    %v351 = vpop.f32.mrb[0].mxu0
    %352 = vdwg.mxu0
    %v353 = vadd.f32 %v112, %v291
    %v354 = vadd.f32 %v113, %v294
    %v355 = vadd.f32 %v114, %v299
    %v356 = vadd.f32 %v115, %v302
    %v357 = vadd.f32 %v116, %v307
    %v358 = vadd.f32 %v117, %v310
    %v359 = vadd.f32 %v118, %v315
    %v360 = vadd.f32 %v119, %v318
    %v361 = vadd.f32 %v120, %v323
    %v362 = vadd.f32 %v121, %v326
    %v363 = vadd.f32 %v122, %v331
    %v364 = vadd.f32 %v123, %v334
    %v365 = vadd.f32 %v124, %v339
    %v366 = vadd.f32 %v125, %v342
    %v367 = vadd.f32 %v126, %v347
    %v368 = vadd.f32 %v127, %v350
    %369 = vst [vmem:[#allocation2] sm:$0xff] %v353
    %370 = vst [vmem:[#allocation2 + $0x8] sm:$0xff] %v354
    %371 = vst [vmem:[#allocation2 + $0x10] sm:$0xff] %v355
    %372 = vst [vmem:[#allocation2 + $0x18] sm:$0xff] %v356
    %373 = vst [vmem:[#allocation2 + $0x20] sm:$0xff] %v357
    %374 = vst [vmem:[#allocation2 + $0x28] sm:$0xff] %v358
    %375 = vst [vmem:[#allocation2 + $0x30] sm:$0xff] %v359
    %376 = vst [vmem:[#allocation2 + $0x38] sm:$0xff] %v360
    %377 = vst [vmem:[#allocation2 + $0x40] sm:$0xff] %v361
    %378 = vst [vmem:[#allocation2 + $0x48] sm:$0xff] %v362
    %379 = vst [vmem:[#allocation2 + $0x50] sm:$0xff] %v363
    %380 = vst [vmem:[#allocation2 + $0x58] sm:$0xff] %v364
    %381 = vst [vmem:[#allocation2 + $0x60] sm:$0xff] %v365
    %382 = vst [vmem:[#allocation2 + $0x68] sm:$0xff] %v366
    %383 = vst [vmem:[#allocation2 + $0x70] sm:$0xff] %v367
    %384 = vst [vmem:[#allocation2 + $0x78] sm:$0xff] %v368
    // Predicated region
    $region50: #{gsgnet_forward.2} parent=1 // pred_check
      %p385 = pneg %p92
    $region51: #{gsgnet_forward.2} parent=1 // pred_check_branch
      %387 = sbr.rel (%p385) target = $region53
    $region52: #{gsgnet_forward.2} parent=1 // pred_region
      %v388 = vld [vmem:[#allocation7] sm:$0xf]
      %v389 = vld [vmem:[#allocation7 + $0x4] sm:$0xf]
      %v390 = vld [vmem:[#allocation7 + $0x8] sm:$0xf]
      %v391 = vld [vmem:[#allocation7 + $0xc] sm:$0xf]
      %v392 = vld [vmem:[#allocation7 + $0x10] sm:$0xf]
      %v393 = vld [vmem:[#allocation7 + $0x14] sm:$0xf]
      %v394 = vld [vmem:[#allocation7 + $0x18] sm:$0xf]
      %v395 = vld [vmem:[#allocation7 + $0x1c] sm:$0xf]
      %v396 = vld [vmem:[#allocation7 + $0x20] sm:$0xf]
      %v397 = vld [vmem:[#allocation7 + $0x24] sm:$0xf]
      %v398 = vld [vmem:[#allocation7 + $0x28] sm:$0xf]
      %v399 = vld [vmem:[#allocation7 + $0x2c] sm:$0xf]
      %v400 = vld [vmem:[#allocation7 + $0x30] sm:$0xf]
      %v401 = vld [vmem:[#allocation7 + $0x34] sm:$0xf]
      %v402 = vld [vmem:[#allocation7 + $0x38] sm:$0xf]
      %v403 = vld [vmem:[#allocation7 + $0x3c] sm:$0xf]
      %v404 = vunpack.c.l.bf16 %v388
      %v405 = vunpack.c.l.bf16 %v389
      %v406 = vunpack.c.l.bf16 %v390
      %v407 = vunpack.c.l.bf16 %v391
      %v408 = vunpack.c.l.bf16 %v392
      %v409 = vunpack.c.l.bf16 %v393
      %v410 = vunpack.c.l.bf16 %v394
      %v411 = vunpack.c.l.bf16 %v395
      %v412 = vunpack.c.l.bf16 %v396
      %v413 = vunpack.c.l.bf16 %v397
      %v414 = vunpack.c.l.bf16 %v398
      %v415 = vunpack.c.l.bf16 %v399
      %v416 = vunpack.c.l.bf16 %v400
      %v417 = vunpack.c.l.bf16 %v401
      %v418 = vunpack.c.l.bf16 %v402
      %v419 = vunpack.c.l.bf16 %v403
      %v420 = vld [vmem:[#allocation8] sm:$0xff]
      %v421 = vld [vmem:[#allocation8 + $0x8] sm:$0xff]
      %v422 = vld [vmem:[#allocation8 + $0x10] sm:$0xff]
      %v423 = vld [vmem:[#allocation8 + $0x18] sm:$0xff]
      %v424 = vld [vmem:[#allocation8 + $0x20] sm:$0xff]
      %v425 = vld [vmem:[#allocation8 + $0x28] sm:$0xff]
      %v426 = vld [vmem:[#allocation8 + $0x30] sm:$0xff]
      %v427 = vld [vmem:[#allocation8 + $0x38] sm:$0xff]
      %v428 = vld [vmem:[#allocation8 + $0x40] sm:$0xff]
      %v429 = vld [vmem:[#allocation8 + $0x48] sm:$0xff]
      %v430 = vld [vmem:[#allocation8 + $0x50] sm:$0xff]
      %v431 = vld [vmem:[#allocation8 + $0x58] sm:$0xff]
      %v432 = vld [vmem:[#allocation8 + $0x60] sm:$0xff]
      %v433 = vld [vmem:[#allocation8 + $0x68] sm:$0xff]
      %v434 = vld [vmem:[#allocation8 + $0x70] sm:$0xff]
      %v435 = vld [vmem:[#allocation8 + $0x78] sm:$0xff]
      %v436 = vld [vmem:[#allocation2] sm:$0xff]
      %v437 = vld [vmem:[#allocation2 + $0x8] sm:$0xff]
      %v438 = vld [vmem:[#allocation2 + $0x10] sm:$0xff]
      %v439 = vld [vmem:[#allocation2 + $0x18] sm:$0xff]
      %v440 = vld [vmem:[#allocation2 + $0x20] sm:$0xff]
      %v441 = vld [vmem:[#allocation2 + $0x28] sm:$0xff]
      %v442 = vld [vmem:[#allocation2 + $0x30] sm:$0xff]
      %v443 = vld [vmem:[#allocation2 + $0x38] sm:$0xff]
      %v444 = vld [vmem:[#allocation2 + $0x40] sm:$0xff]
      %v445 = vld [vmem:[#allocation2 + $0x48] sm:$0xff]
      %v446 = vld [vmem:[#allocation2 + $0x50] sm:$0xff]
      %v447 = vld [vmem:[#allocation2 + $0x58] sm:$0xff]
      %v448 = vld [vmem:[#allocation2 + $0x60] sm:$0xff]
      %v449 = vld [vmem:[#allocation2 + $0x68] sm:$0xff]
      %v450 = vld [vmem:[#allocation2 + $0x70] sm:$0xff]
      %v451 = vld [vmem:[#allocation2 + $0x78] sm:$0xff]
      %v452 = vld [vmem:[#allocation10] sm:$0xff]
      %v453 = vld [vmem:[#allocation10 + $0x8] sm:$0xff]
      %v454 = vld [vmem:[#allocation10 + $0x10] sm:$0xff]
      %v455 = vld [vmem:[#allocation10 + $0x18] sm:$0xff]
      %v456 = vld [vmem:[#allocation10 + $0x20] sm:$0xff]
      %v457 = vld [vmem:[#allocation10 + $0x28] sm:$0xff]
      %v458 = vld [vmem:[#allocation10 + $0x30] sm:$0xff]
      %v459 = vld [vmem:[#allocation10 + $0x38] sm:$0xff]
      %v460 = vld [vmem:[#allocation10 + $0x40] sm:$0xff]
      %v461 = vld [vmem:[#allocation10 + $0x48] sm:$0xff]
      %v462 = vld [vmem:[#allocation10 + $0x50] sm:$0xff]
      %v463 = vld [vmem:[#allocation10 + $0x58] sm:$0xff]
      %v464 = vld [vmem:[#allocation10 + $0x60] sm:$0xff]
      %v465 = vld [vmem:[#allocation10 + $0x68] sm:$0xff]
      %v466 = vld [vmem:[#allocation10 + $0x70] sm:$0xff]
      %v467 = vld [vmem:[#allocation10 + $0x78] sm:$0xff]
      %468 = vmatprep.subr.mxu0 0.0
      %469 = vmatpush1.msra.mxu0 %v452
      %470 = vmatprep.subr.mxu0 0.0
      %471 = vmatpush1.msra.mxu0 %v453
      %472 = vmatprep.subr.mxu0 0.0
      %473 = vmatpush1.msra.mxu0 %v454
      %474 = vmatprep.subr.mxu0 0.0
      %475 = vmatpush1.msra.mxu0 %v455
      %476 = vmatprep.subr.mxu0 0.0
      %477 = vmatpush1.msra.mxu0 %v456
      %478 = vmatprep.subr.mxu0 0.0
      %479 = vmatpush1.msra.mxu0 %v457
      %480 = vmatprep.subr.mxu0 0.0
      %481 = vmatpush1.msra.mxu0 %v458
      %482 = vmatprep.subr.mxu0 0.0
      %483 = vmatpush1.msra.mxu0 %v459
      %484 = vmatprep.subr.mxu0 0.0
      %485 = vmatpush1.msra.mxu0 %v460
      %486 = vmatprep.subr.mxu0 0.0
      %487 = vmatpush1.msra.mxu0 %v461
      %488 = vmatprep.subr.mxu0 0.0
      %489 = vmatpush1.msra.mxu0 %v462
      %490 = vmatprep.subr.mxu0 0.0
      %491 = vmatpush1.msra.mxu0 %v463
      %492 = vmatprep.subr.mxu0 0.0
      %493 = vmatpush1.msra.mxu0 %v464
      %494 = vmatprep.subr.mxu0 0.0
      %495 = vmatpush1.msra.mxu0 %v465
      %496 = vmatprep.subr.mxu0 0.0
      %497 = vmatpush1.msra.mxu0 %v466
      %498 = vmatprep.subr.mxu0 0.0
      %499 = vmatpush1.msra.mxu0 %v467
      %500 = vmatprep.subr.mxu0 0.0
      %501 = vmatpush1.msra.mxu0 0.0
      %502 = vmatprep.subr.mxu0 0.0
      %503 = vmatpush1.msra.mxu0 0.0
      %504 = vmatprep.subr.mxu0 0.0
      %505 = vmatpush1.msra.mxu0 0.0
      %506 = vmatprep.subr.mxu0 0.0
      %507 = vmatpush1.msra.mxu0 0.0
      %508 = vmatprep.subr.mxu0 0.0
      %509 = vmatpush1.msra.mxu0 0.0
      %510 = vmatprep.subr.mxu0 0.0
      %511 = vmatpush1.msra.mxu0 0.0
      %512 = vmatprep.subr.mxu0 0.0
      %513 = vmatpush1.msra.mxu0 0.0
      %514 = vmatprep.subr.mxu0 0.0
      %515 = vmatpush1.msra.mxu0 0.0
      %516 = vmatprep.subr.mxu0 0.0
      %517 = vmatpush1.msra.mxu0 0.0
      %518 = vmatprep.subr.mxu0 0.0
      %519 = vmatpush1.msra.mxu0 0.0
      %520 = vmatprep.subr.mxu0 0.0
      %521 = vmatpush1.msra.mxu0 0.0
      %522 = vmatprep.subr.mxu0 0.0
      %523 = vmatpush1.msra.mxu0 0.0
      %524 = vmatprep.subr.mxu0 0.0
      %525 = vmatpush1.msra.mxu0 0.0
      %526 = vmatprep.subr.mxu0 0.0
      %527 = vmatpush1.msra.mxu0 0.0
      %528 = vmatprep.subr.mxu0 0.0
      %529 = vmatpush1.msra.mxu0 0.0
      %530 = vmatprep.subr.mxu0 0.0
      %531 = vmatpush1.msra.mxu0 0.0
      %532 = vmatprep.mubr.f32.mxu0 0.0
      %533 = vmatmul.mubr.f32.gmra.mrb[0].mxu0 %v436
      %v534 = vpop.f32.mrb[0].mxu0
      %v535 = vadd.f32 0.0, %v534
      %v536 = vpop.f32.mrb[0].mxu0
      %537 = vmatprep.mubr.f32.mxu0 0.0
      %538 = vmatmul.mubr.f32.gmra.mrb[0].mxu0 %v437
      %v539 = vpop.f32.mrb[0].mxu0
      %v540 = vadd.f32 0.0, %v539
      %v541 = vpop.f32.mrb[0].mxu0
      %542 = vmatprep.mubr.f32.mxu0 0.0
      %543 = vmatmul.mubr.f32.gmra.mrb[0].mxu0 %v438
      %v544 = vpop.f32.mrb[0].mxu0
      %v545 = vadd.f32 0.0, %v544
      %v546 = vpop.f32.mrb[0].mxu0
      %547 = vmatprep.mubr.f32.mxu0 0.0
      %548 = vmatmul.mubr.f32.gmra.mrb[0].mxu0 %v439
      %v549 = vpop.f32.mrb[0].mxu0
      %v550 = vadd.f32 0.0, %v549
      %v551 = vpop.f32.mrb[0].mxu0
      %552 = vmatprep.mubr.f32.mxu0 0.0
      %553 = vmatmul.mubr.f32.gmra.mrb[0].mxu0 %v440
      %v554 = vpop.f32.mrb[0].mxu0
      %v555 = vadd.f32 0.0, %v554
      %v556 = vpop.f32.mrb[0].mxu0
      %557 = vmatprep.mubr.f32.mxu0 0.0
      %558 = vmatmul.mubr.f32.gmra.mrb[0].mxu0 %v441
      %v559 = vpop.f32.mrb[0].mxu0
      %v560 = vadd.f32 0.0, %v559
      %v561 = vpop.f32.mrb[0].mxu0
      %562 = vmatprep.mubr.f32.mxu0 0.0
      %563 = vmatmul.mubr.f32.gmra.mrb[0].mxu0 %v442
      %v564 = vpop.f32.mrb[0].mxu0
      %v565 = vadd.f32 0.0, %v564
      %v566 = vpop.f32.mrb[0].mxu0
      %567 = vmatprep.mubr.f32.mxu0 0.0
      %568 = vmatmul.mubr.f32.gmra.mrb[0].mxu0 %v443
      %v569 = vpop.f32.mrb[0].mxu0
      %v570 = vadd.f32 0.0, %v569
      %v571 = vpop.f32.mrb[0].mxu0
      %572 = vmatprep.mubr.f32.mxu0 0.0
      %573 = vmatmul.mubr.f32.gmra.mrb[0].mxu0 %v444
      %v574 = vpop.f32.mrb[0].mxu0
      %v575 = vadd.f32 0.0, %v574
      %v576 = vpop.f32.mrb[0].mxu0
      %577 = vmatprep.mubr.f32.mxu0 0.0
      %578 = vmatmul.mubr.f32.gmra.mrb[0].mxu0 %v445
      %v579 = vpop.f32.mrb[0].mxu0
      %v580 = vadd.f32 0.0, %v579
      %v581 = vpop.f32.mrb[0].mxu0
      %582 = vmatprep.mubr.f32.mxu0 0.0
      %583 = vmatmul.mubr.f32.gmra.mrb[0].mxu0 %v446
      %v584 = vpop.f32.mrb[0].mxu0
      %v585 = vadd.f32 0.0, %v584
      %v586 = vpop.f32.mrb[0].mxu0
      %587 = vmatprep.mubr.f32.mxu0 0.0
      %588 = vmatmul.mubr.f32.gmra.mrb[0].mxu0 %v447
      %v589 = vpop.f32.mrb[0].mxu0
      %v590 = vadd.f32 0.0, %v589
      %v591 = vpop.f32.mrb[0].mxu0
      %592 = vmatprep.mubr.f32.mxu0 0.0
      %593 = vmatmul.mubr.f32.gmra.mrb[0].mxu0 %v448
      %v594 = vpop.f32.mrb[0].mxu0
      %v595 = vadd.f32 0.0, %v594
      %v596 = vpop.f32.mrb[0].mxu0
      %597 = vmatprep.mubr.f32.mxu0 0.0
      %598 = vmatmul.mubr.f32.gmra.mrb[0].mxu0 %v449
      %v599 = vpop.f32.mrb[0].mxu0
      %v600 = vadd.f32 0.0, %v599
      %v601 = vpop.f32.mrb[0].mxu0
      %602 = vmatprep.mubr.f32.mxu0 0.0
      %603 = vmatmul.mubr.f32.gmra.mrb[0].mxu0 %v450
      %v604 = vpop.f32.mrb[0].mxu0
      %v605 = vadd.f32 0.0, %v604
      %v606 = vpop.f32.mrb[0].mxu0
      %607 = vmatprep.mubr.f32.mxu0 0.0
      %608 = vmatmul.mubr.f32.gmra.mrb[0].mxu0 %v451
      %v609 = vpop.f32.mrb[0].mxu0
      %v610 = vadd.f32 0.0, %v609
      %v611 = vpop.f32.mrb[0].mxu0
      %612 = vdwg.mxu0
      %613 = vmatprep.subr.mxu0 0.0
      %614 = vmatpush1.msra.mxu0 %v420
      %615 = vmatprep.subr.mxu0 0.0
      %616 = vmatpush1.msra.mxu0 %v421
      %617 = vmatprep.subr.mxu0 0.0
      %618 = vmatpush1.msra.mxu0 %v422
      %619 = vmatprep.subr.mxu0 0.0
      %620 = vmatpush1.msra.mxu0 %v423
      %621 = vmatprep.subr.mxu0 0.0
      %622 = vmatpush1.msra.mxu0 %v424
      %623 = vmatprep.subr.mxu0 0.0
      %624 = vmatpush1.msra.mxu0 %v425
      %625 = vmatprep.subr.mxu0 0.0
      %626 = vmatpush1.msra.mxu0 %v426
      %627 = vmatprep.subr.mxu0 0.0
      %628 = vmatpush1.msra.mxu0 %v427
      %629 = vmatprep.subr.mxu0 0.0
      %630 = vmatpush1.msra.mxu0 %v428
      %631 = vmatprep.subr.mxu0 0.0
      %632 = vmatpush1.msra.mxu0 %v429
      %633 = vmatprep.subr.mxu0 0.0
      %634 = vmatpush1.msra.mxu0 %v430
      %635 = vmatprep.subr.mxu0 0.0
      %636 = vmatpush1.msra.mxu0 %v431
      %637 = vmatprep.subr.mxu0 0.0
      %638 = vmatpush1.msra.mxu0 %v432
      %639 = vmatprep.subr.mxu0 0.0
      %640 = vmatpush1.msra.mxu0 %v433
      %641 = vmatprep.subr.mxu0 0.0
      %642 = vmatpush1.msra.mxu0 %v434
      %643 = vmatprep.subr.mxu0 0.0
      %644 = vmatpush1.msra.mxu0 %v435
      %645 = vmatprep.subr.mxu0 0.0
      %646 = vmatpush1.msra.mxu0 0.0
      %647 = vmatprep.subr.mxu0 0.0
      %648 = vmatpush1.msra.mxu0 0.0
      %649 = vmatprep.subr.mxu0 0.0
      %650 = vmatpush1.msra.mxu0 0.0
      %651 = vmatprep.subr.mxu0 0.0
      %652 = vmatpush1.msra.mxu0 0.0
      %653 = vmatprep.subr.mxu0 0.0
      %654 = vmatpush1.msra.mxu0 0.0
      %655 = vmatprep.subr.mxu0 0.0
      %656 = vmatpush1.msra.mxu0 0.0
      %657 = vmatprep.subr.mxu0 0.0
      %658 = vmatpush1.msra.mxu0 0.0
      %659 = vmatprep.subr.mxu0 0.0
      %660 = vmatpush1.msra.mxu0 0.0
      %661 = vmatprep.subr.mxu0 0.0
      %662 = vmatpush1.msra.mxu0 0.0
      %663 = vmatprep.subr.mxu0 0.0
      %664 = vmatpush1.msra.mxu0 0.0
      %665 = vmatprep.subr.mxu0 0.0
      %666 = vmatpush1.msra.mxu0 0.0
      %667 = vmatprep.subr.mxu0 0.0
      %668 = vmatpush1.msra.mxu0 0.0
      %669 = vmatprep.subr.mxu0 0.0
      %670 = vmatpush1.msra.mxu0 0.0
      %671 = vmatprep.subr.mxu0 0.0
      %672 = vmatpush1.msra.mxu0 0.0
      %673 = vmatprep.subr.mxu0 0.0
      %674 = vmatpush1.msra.mxu0 0.0
      %675 = vmatprep.subr.mxu0 0.0
      %676 = vmatpush1.msra.mxu0 0.0
      %677 = vmatprep.mubr.f32.mxu0 0.0
      %678 = vmatmul.mubr.f32.gmra.mrb[0].mxu0 %v404
      %v679 = vpop.f32.mrb[0].mxu0
      %v680 = vadd.f32 %v535, %v679
      %v681 = vpop.f32.mrb[0].mxu0
      %682 = vmatprep.mubr.f32.mxu0 0.0
      %683 = vmatmul.mubr.f32.gmra.mrb[0].mxu0 %v405
      %v684 = vpop.f32.mrb[0].mxu0
      %v685 = vadd.f32 %v540, %v684
      %v686 = vpop.f32.mrb[0].mxu0
      %687 = vmatprep.mubr.f32.mxu0 0.0
      %688 = vmatmul.mubr.f32.gmra.mrb[0].mxu0 %v406
      %v689 = vpop.f32.mrb[0].mxu0
      %v690 = vadd.f32 %v545, %v689
      %v691 = vpop.f32.mrb[0].mxu0
      %692 = vmatprep.mubr.f32.mxu0 0.0
      %693 = vmatmul.mubr.f32.gmra.mrb[0].mxu0 %v407
      %v694 = vpop.f32.mrb[0].mxu0
      %v695 = vadd.f32 %v550, %v694
      %v696 = vpop.f32.mrb[0].mxu0
      %697 = vmatprep.mubr.f32.mxu0 0.0
      %698 = vmatmul.mubr.f32.gmra.mrb[0].mxu0 %v408
      %v699 = vpop.f32.mrb[0].mxu0
      %v700 = vadd.f32 %v555, %v699
      %v701 = vpop.f32.mrb[0].mxu0
      %702 = vmatprep.mubr.f32.mxu0 0.0
      %703 = vmatmul.mubr.f32.gmra.mrb[0].mxu0 %v409
      %v704 = vpop.f32.mrb[0].mxu0
      %v705 = vadd.f32 %v560, %v704
      %v706 = vpop.f32.mrb[0].mxu0
      %707 = vmatprep.mubr.f32.mxu0 0.0
      %708 = vmatmul.mubr.f32.gmra.mrb[0].mxu0 %v410
      %v709 = vpop.f32.mrb[0].mxu0
      %v710 = vadd.f32 %v565, %v709
      %v711 = vpop.f32.mrb[0].mxu0
      %712 = vmatprep.mubr.f32.mxu0 0.0
      %713 = vmatmul.mubr.f32.gmra.mrb[0].mxu0 %v411
      %v714 = vpop.f32.mrb[0].mxu0
      %v715 = vadd.f32 %v570, %v714
      %v716 = vpop.f32.mrb[0].mxu0
      %717 = vmatprep.mubr.f32.mxu0 0.0
      %718 = vmatmul.mubr.f32.gmra.mrb[0].mxu0 %v412
      %v719 = vpop.f32.mrb[0].mxu0
      %v720 = vadd.f32 %v575, %v719
      %v721 = vpop.f32.mrb[0].mxu0
      %722 = vmatprep.mubr.f32.mxu0 0.0
      %723 = vmatmul.mubr.f32.gmra.mrb[0].mxu0 %v413
      %v724 = vpop.f32.mrb[0].mxu0
      %v725 = vadd.f32 %v580, %v724
      %v726 = vpop.f32.mrb[0].mxu0
      %727 = vmatprep.mubr.f32.mxu0 0.0
      %728 = vmatmul.mubr.f32.gmra.mrb[0].mxu0 %v414
      %v729 = vpop.f32.mrb[0].mxu0
      %v730 = vadd.f32 %v585, %v729
      %v731 = vpop.f32.mrb[0].mxu0
      %732 = vmatprep.mubr.f32.mxu0 0.0
      %733 = vmatmul.mubr.f32.gmra.mrb[0].mxu0 %v415
      %v734 = vpop.f32.mrb[0].mxu0
      %v735 = vadd.f32 %v590, %v734
      %v736 = vpop.f32.mrb[0].mxu0
      %737 = vmatprep.mubr.f32.mxu0 0.0
      %738 = vmatmul.mubr.f32.gmra.mrb[0].mxu0 %v416
      %v739 = vpop.f32.mrb[0].mxu0
      %v740 = vadd.f32 %v595, %v739
      %v741 = vpop.f32.mrb[0].mxu0
      %742 = vmatprep.mubr.f32.mxu0 0.0
      %743 = vmatmul.mubr.f32.gmra.mrb[0].mxu0 %v417
      %v744 = vpop.f32.mrb[0].mxu0
      %v745 = vadd.f32 %v600, %v744
      %v746 = vpop.f32.mrb[0].mxu0
      %747 = vmatprep.mubr.f32.mxu0 0.0
      %748 = vmatmul.mubr.f32.gmra.mrb[0].mxu0 %v418
      %v749 = vpop.f32.mrb[0].mxu0
      %v750 = vadd.f32 %v605, %v749
      %v751 = vpop.f32.mrb[0].mxu0
      %752 = vmatprep.mubr.f32.mxu0 0.0
      %753 = vmatmul.mubr.f32.gmra.mrb[0].mxu0 %v419
      %v754 = vpop.f32.mrb[0].mxu0
      %v755 = vadd.f32 %v610, %v754
      %v756 = vpop.f32.mrb[0].mxu0
      %757 = vdwg.mxu0
      %v758 = vld [vmem:[%s5] sm:$0x1]
      %v760 = vlaneseq
      %v761 = vshrl.u32 %v760, 7
      %v762 = vsub.s32 0, %v761
      %v763 = vrot.slane %v758, %v762
      %v765 = vadd.f32 %v680, %v763
      %v766 = vadd.f32 %v685, %v763
      %v767 = vadd.f32 %v690, %v763
      %v768 = vadd.f32 %v695, %v763
      %v769 = vadd.f32 %v700, %v763
      %v770 = vadd.f32 %v705, %v763
      %v771 = vadd.f32 %v710, %v763
      %v772 = vadd.f32 %v715, %v763
      %v773 = vadd.f32 %v720, %v763
      %v774 = vadd.f32 %v725, %v763
      %v775 = vadd.f32 %v730, %v763
      %v776 = vadd.f32 %v735, %v763
      %v777 = vadd.f32 %v740, %v763
      %v778 = vadd.f32 %v745, %v763
      %v779 = vadd.f32 %v750, %v763
      %v780 = vadd.f32 %v755, %v763
      %v781 = vmax.f32 %v765, 0.0
      %v782 = vmax.f32 %v766, 0.0
      %v783 = vmax.f32 %v767, 0.0
      %v784 = vmax.f32 %v768, 0.0
      %v785 = vmax.f32 %v769, 0.0
      %v786 = vmax.f32 %v770, 0.0
      %v787 = vmax.f32 %v771, 0.0
      %v788 = vmax.f32 %v772, 0.0
      %v789 = vmax.f32 %v773, 0.0
      %v790 = vmax.f32 %v774, 0.0
      %v791 = vmax.f32 %v775, 0.0
      %v792 = vmax.f32 %v776, 0.0
      %v793 = vmax.f32 %v777, 0.0
      %v794 = vmax.f32 %v778, 0.0
      %v795 = vmax.f32 %v779, 0.0
      %v796 = vmax.f32 %v780, 0.0
      %v797 = vpack.c.bf16 %v782, %v781
      %v798 = vpack.c.bf16 %v784, %v783
      %v799 = vpack.c.bf16 %v786, %v785
      %v800 = vpack.c.bf16 %v788, %v787
      %v801 = vpack.c.bf16 %v790, %v789
      %v802 = vpack.c.bf16 %v792, %v791
      %v803 = vpack.c.bf16 %v794, %v793
      %v804 = vpack.c.bf16 %v796, %v795
      %v813 = vunpack.c.l.b16 %v797
      %v814 = vunpack.c.h.b16 %v797
      %v815 = vunpack.c.l.b16 %v798
      %v816 = vunpack.c.h.b16 %v798
      %v817 = vunpack.c.l.b16 %v799
      %v818 = vunpack.c.h.b16 %v799
      %v819 = vunpack.c.l.b16 %v800
      %v820 = vunpack.c.h.b16 %v800
      %v821 = vunpack.c.l.b16 %v801
      %v822 = vunpack.c.h.b16 %v801
      %v823 = vunpack.c.l.b16 %v802
      %v824 = vunpack.c.h.b16 %v802
      %v825 = vunpack.c.l.b16 %v803
      %v826 = vunpack.c.h.b16 %v803
      %v827 = vunpack.c.l.b16 %v804
      %v828 = vunpack.c.h.b16 %v804
      %v829 = vpack.c.b16 %v813, %v813
      %v830 = vpack.c.b16 %v814, %v814
      %v831 = vpack.c.b16 %v815, %v815
      %v832 = vpack.c.b16 %v816, %v816
      %v833 = vpack.c.b16 %v817, %v817
      %v834 = vpack.c.b16 %v818, %v818
      %v835 = vpack.c.b16 %v819, %v819
      %v836 = vpack.c.b16 %v820, %v820
      %v837 = vpack.c.b16 %v821, %v821
      %v838 = vpack.c.b16 %v822, %v822
      %v839 = vpack.c.b16 %v823, %v823
      %v840 = vpack.c.b16 %v824, %v824
      %v841 = vpack.c.b16 %v825, %v825
      %v842 = vpack.c.b16 %v826, %v826
      %v843 = vpack.c.b16 %v827, %v827
      %v844 = vpack.c.b16 %v828, %v828
      %861 = vst [vmem:[%s6] sm:$0xf] %v829
      %862 = vst [vmem:[%s6 + $0x4] sm:$0xf] %v830
      %863 = vst [vmem:[%s6 + $0x8] sm:$0xf] %v831
      %864 = vst [vmem:[%s6 + $0xc] sm:$0xf] %v832
      %865 = vst [vmem:[%s6 + $0x10] sm:$0xf] %v833
      %866 = vst [vmem:[%s6 + $0x14] sm:$0xf] %v834
      %867 = vst [vmem:[%s6 + $0x18] sm:$0xf] %v835
      %868 = vst [vmem:[%s6 + $0x1c] sm:$0xf] %v836
      %869 = vst [vmem:[%s6 + $0x20] sm:$0xf] %v837
      %870 = vst [vmem:[%s6 + $0x24] sm:$0xf] %v838
      %871 = vst [vmem:[%s6 + $0x28] sm:$0xf] %v839
      %872 = vst [vmem:[%s6 + $0x2c] sm:$0xf] %v840
      %873 = vst [vmem:[%s6 + $0x30] sm:$0xf] %v841
      %874 = vst [vmem:[%s6 + $0x34] sm:$0xf] %v842
      %875 = vst [vmem:[%s6 + $0x38] sm:$0xf] %v843
      %876 = vst [vmem:[%s6 + $0x3c] sm:$0xf] %v844
    $region53: #{gsgnet_forward.2} parent=1 // pred_fallthru
      _
    // Predicated region
    $region54: #{gsgnet_forward.2} parent=1 // pred_check
      _
    $region55: #{gsgnet_forward.2} parent=1 // pred_check_branch
      %878 = sbr.rel (0) target = $region57
    $region56: #{gsgnet_forward.2} parent=1 // pred_region
      _
    $region57: #{gsgnet_forward.2} parent=1 // pred_fallthru
      _
    // Predicated region
    $region58: #{gsgnet_forward.2} parent=1 // pred_check
      _
    $region59: #{gsgnet_forward.2} parent=1 // pred_check_branch
      %880 = sbr.rel (0) target = $region61
    $region60: #{gsgnet_forward.2} parent=1 // pred_region
      _
    $region61: #{gsgnet_forward.2} parent=1 // pred_fallthru
      _
    %881 = vsyncpa [#allocation4], 1
    %882 = vsyncpa [#allocation6], 1
    %883 = vsyncpa [#allocation9], 1

</llo_original>
